<compile_context>
chip_gen: v7x
topology: tpu7x:2x2x1
jax: 0.10.0
libtpu: 0.0.40
codegen_flags: <defaults>
</compile_context>

<pallas_src>
import jax
import jax.numpy as jnp
from jax.experimental import pallas as pl
from jax.experimental.pallas import tpu as pltpu

_EPS = 1e-5  # nn.GroupNorm default eps

# MXU operand dtype for the two 1x1-conv matmuls.  On v6e / v7x this can be set
# to jnp.bfloat16 (halves matmul-operand VMEM/DMA; accumulation stays f32 via
# preferred_element_type).  Kept at float32 here so the self-test matches the
# f32 reference tightly on every TPU generation (incl. v5e).
_MATMUL_DTYPE = jnp.float32


def _make_ghost_ffn_kernel(H, W, C, paths, pad):
    L = H * W
    n_layers = paths * (paths + 1) // 2
    inv_n = 1.0 / float(L * C)

    def kernel(x_ref, w_pwT_ref, w_dw_ref, gn_g_ref, gn_b_ref,
               w_fcT_ref, b_fc_ref, wmask_ref, o_ref, zpad_ref):
        x = x_ref[0]                       # (L, C) activations for this batch el.
        w_dw = w_dw_ref[...]               # (n_layers*9, C) depthwise taps
        gn_g = gn_g_ref[...]               # (n_layers+1, C) GroupNorm gammas
        gn_b = gn_b_ref[...]               # (n_layers+1, C) GroupNorm betas
        mask_l = wmask_ref[:, 0:1]         # (L,1): 1 where the w-1 neighbour exists
        mask_r = wmask_ref[:, 1:2]         # (L,1): 1 where the w+1 neighbour exists

        # Zero the halo rows of the depthwise scratch once per invocation; the
        # interior is fully overwritten each layer, so the halos implement the
        # conv's zero padding along the H direction of the flattened axis.
        zpad_ref[pl.ds(0, pad), :] = jnp.zeros((pad, C), jnp.float32)
        zpad_ref[pl.ds(pad + L, pad), :] = jnp.zeros((pad, C), jnp.float32)

        def group_norm(z, idx):
            # GroupNorm(1, C): stats over the whole (L, C) slab, single fused pass.
            s1 = jnp.sum(z)
            s2 = jnp.sum(z * z)
            mean = s1 * inv_n
            var = s2 * inv_n - mean * mean
            inv = jax.lax.rsqrt(var + _EPS)
            scale = gn_g[idx:idx + 1, :] * inv            # (1, C)
            shift = gn_b[idx:idx + 1, :] - mean * scale   # (1, C)
            return z * scale + shift

        def dw3x3(z, layer):
            # Depthwise 3x3, stride 1, padding 1, on the flattened (L, C) layout.
            zpad_ref[pl.ds(pad, L), :] = z
            acc = None
            for di in (-1, 0, 1):
                for dj in (-1, 0, 1):
                    t = layer * 9 + (di + 1) * 3 + (dj + 1)
                    tap = w_dw[t:t + 1, :]                             # (1, C)
                    nbr = zpad_ref[pl.ds(pad + di * W + dj, L), :]     # (L, C)
                    contrib = tap * nbr
                    if dj == -1:                                       # w-1 column tap
                        contrib = contrib * mask_l
                    elif dj == 1:                                      # w+1 column tap
                        contrib = contrib * mask_r
                    acc = contrib if acc is None else acc + contrib
            return acc

        # 1) MultiGhostConv.pw_conv : 1x1 conv (no bias) + GroupNorm(1, C)  [MXU]
        y = jnp.dot(x.astype(_MATMUL_DTYPE), w_pwT_ref[...],
                    preferred_element_type=jnp.float32)
        y = group_norm(y, 0)

        # 2)-4) Ghost paths (path p applies p+1 dwconv+GN layers), Hardswish per
        # path, and the final 1x1 fc accumulated per path (no concat buffer).
        out = None
        layer = 0
        for p in range(paths):
            z = y
            for _ in range(p + 1):
                z = group_norm(dw3x3(z, layer), layer + 1)
                layer += 1
            hs = z * jnp.clip(z + 3.0, 0.0, 6.0) * (1.0 / 6.0)         # Hardswish
            contrib = jnp.dot(hs.astype(_MATMUL_DTYPE),
                              w_fcT_ref[pl.ds(p * C, C), :],
                              preferred_element_type=jnp.float32)
            out = contrib if out is None else out + contrib

        # Dropout2d(0.0) is identity; add the fc bias and store lane-dense (L, C).
        o_ref[0] = out + b_fc_ref[...]

    return kernel


def ghost_ffn_pallas(x_blc, w_pw, w_dw, gn_g, gn_b, w_fc, b_fc, H, W):
    """x_blc: (B, L, C); weights in the PyTorch module's layouts."""
    B, L, C = x_blc.shape
    assert H * W == L
    paths = w_fc.shape[1] // C
    n_layers = w_dw.shape[0]
    assert n_layers == paths * (paths + 1) // 2

    # Halo (>= W+1 rows) rounded up to the sublane size so the interior store
    # into the depthwise scratch stays 8-aligned.
    pad = ((W + 1 + 7) // 8) * 8

    # Compact 2-D parameter layouts (lane-contiguous rows of C); matmul weights
    # pre-transposed so the kernel issues plain (M,K)@(K,N) MXU dots.
    w_pwT_k = jnp.transpose(w_pw).astype(_MATMUL_DTYPE)                   # (C, C)
    w_dw_k = jnp.transpose(w_dw, (0, 2, 3, 1)).reshape(n_layers * 9, C)   # (NL*9, C)
    gn_g_k = gn_g.reshape(n_layers + 1, C)
    gn_b_k = gn_b.reshape(n_layers + 1, C)
    w_fcT_k = jnp.transpose(w_fc).astype(_MATMUL_DTYPE)                   # (paths*C, C)
    b_fc_k = b_fc.reshape(1, C)

    # W-boundary validity masks for the flattened +-1 column taps.
    w_idx = jnp.arange(L, dtype=jnp.int32) % W
    wmask = jnp.stack([(w_idx >= 1).astype(jnp.float32),
                       (w_idx <= W - 2).astype(jnp.float32)], axis=-1)    # (L, 2)

    kernel = _make_ghost_ffn_kernel(H, W, C, paths, pad)

    def const_spec(shape):
        n = len(shape)
        # Grid-invariant: constant block index -> stays resident across the grid.
        return pl.BlockSpec(shape, lambda b: (0,) * n)

    flops = B * (2 * C * C * L                  # pw 1x1 matmul
                 + 2 * paths * C * C * L        # fc 1x1 matmuls
                 + n_layers * 18 * C * L        # depthwise 3x3 MACs
                 + (n_layers + 1) * 6 * C * L   # GroupNorm
                 + paths * 5 * C * L)           # Hardswish
    bytes_accessed = 4 * (2 * B * L * C + w_pwT_k.size + w_dw_k.size +
                          gn_g_k.size + gn_b_k.size + w_fcT_k.size +
                          b_fc_k.size + wmask.size)

    return pl.pallas_call(
        kernel,
        out_shape=jax.ShapeDtypeStruct((B, L, C), jnp.float32),
        grid_spec=pltpu.PrefetchScalarGridSpec(
            num_scalar_prefetch=0,
            grid=(B,),
            in_specs=[
                pl.BlockSpec((1, L, C), lambda b: (b, 0, 0)),
                const_spec(w_pwT_k.shape),
                const_spec(w_dw_k.shape),
                const_spec(gn_g_k.shape),
                const_spec(gn_b_k.shape),
                const_spec(w_fcT_k.shape),
                const_spec(b_fc_k.shape),
                const_spec(wmask.shape),
            ],
            out_specs=pl.BlockSpec((1, L, C), lambda b: (b, 0, 0)),
            scratch_shapes=[pltpu.VMEM((L + 2 * pad, C), jnp.float32)],
        ),
        compiler_params=pltpu.CompilerParams(
            dimension_semantics=("parallel",)),
        cost_estimate=pl.CostEstimate(
            flops=int(flops),
            transcendentals=int(B * (n_layers + 1)),
            bytes_accessed=int(bytes_accessed)),
    )(x_blc, w_pwT_k, w_dw_k, gn_g_k, gn_b_k, w_fcT_k, b_fc_k, wmask)


def ghost_ffn_ref(x_blc, w_pw, w_dw, gn_g, gn_b, w_fc, b_fc, H, W):
    """Pure-JAX reference mirroring the PyTorch forward (f32, HIGHEST precision)."""
    B, L, C = x_blc.shape
    paths = w_fc.shape[1] // C
    x = jnp.transpose(x_blc, (0, 2, 1)).reshape(B, C, H, W)

    def gn(z, g, b):
        m = jnp.mean(z, axis=(1, 2, 3), keepdims=True)
        v = jnp.mean((z - m) ** 2, axis=(1, 2, 3), keepdims=True)
        return (z - m) / jnp.sqrt(v + _EPS) * g.reshape(1, C, 1, 1) + b.reshape(1, C, 1, 1)

    def dw(z, w):
        zp = jnp.pad(z, ((0, 0), (0, 0), (1, 1), (1, 1)))
        out = jnp.zeros_like(z)
        for di in range(3):
            for dj in range(3):
                out = out + w[:, di, dj].reshape(1, C, 1, 1) * zp[:, :, di:di + H, dj:dj + W]
        return out

    y = jnp.einsum('ok,bkhw->bohw', w_pw, x, precision=jax.lax.Precision.HIGHEST)
    y = gn(y, gn_g[0], gn_b[0])

    feats = []
    layer = 0
    for p in range(paths):
        z = y
        for _ in range(p + 1):
            z = gn(dw(z, w_dw[layer]), gn_g[layer + 1], gn_b[layer + 1])
            layer += 1
        feats.append(z)
    cat = jnp.concatenate(feats, axis=1)
    cat = cat * jnp.clip(cat + 3.0, 0.0, 6.0) / 6.0
    out = jnp.einsum('ok,bkhw->bohw', w_fc, cat,
                     precision=jax.lax.Precision.HIGHEST) + b_fc.reshape(1, C, 1, 1)
    return jnp.transpose(out.reshape(B, C, L), (0, 2, 1))


if __name__ == "__main__":
    # GhostFFN(in_features=C, mlp_ratio=2): paths=2, hidden=C, fc: 2C -> C.
    B, C, H, W = 2, 8, 8, 8
    L = H * W
    paths = 2
    n_layers = paths * (paths + 1) // 2  # dw layers: [path0: L0], [path1: L1, L2]

    key = jax.random.PRNGKey(0)
    ks = jax.random.split(key, 7)
    w_pw = 0.3 * jax.random.normal(ks[0], (C, C), jnp.float32)               # pw 1x1, no bias
    w_dw = 0.3 * jax.random.normal(ks[1], (n_layers, C, 3, 3), jnp.float32)  # depthwise 3x3
    gn_g = 1.0 + 0.1 * jax.random.normal(ks[2], (n_layers + 1, C), jnp.float32)
    gn_b = 0.1 * jax.random.normal(ks[3], (n_layers + 1, C), jnp.float32)
    w_fc = 0.3 * jax.random.normal(ks[4], (C, paths * C), jnp.float32)       # fc 1x1
    b_fc = 0.1 * jax.random.normal(ks[5], (C,), jnp.float32)
    x = jax.random.normal(ks[6], (B, L, C), jnp.float32)

    out = jax.block_until_ready(
        ghost_ffn_pallas(x, w_pw, w_dw, gn_g, gn_b, w_fc, b_fc, H, W))
    ref = jax.block_until_ready(
        ghost_ffn_ref(x, w_pw, w_dw, gn_g, gn_b, w_fc, b_fc, H, W))

    assert out.shape == (B, L, C)
    # 2e-2 tolerance covers possible bf16-pass MXU rounding of the two 1x1-conv
    # matmuls versus the Precision.HIGHEST f32 reference.
    assert jnp.allclose(out, ref, atol=2e-2, rtol=2e-2), float(jnp.max(jnp.abs(out - ref)))

    print("KERNEL_OK")
</pallas_src>

<mosaic_0001>
module attributes {stable_mosaic.version = 11 : i64} {
  func.func @kernel(%arg0: i32, %arg1: memref<1x64x8xf32, #tpu.memory_space<vmem>>, %arg2: memref<8x8xf32, #tpu.memory_space<vmem>>, %arg3: memref<27x8xf32, #tpu.memory_space<vmem>>, %arg4: memref<4x8xf32, #tpu.memory_space<vmem>>, %arg5: memref<4x8xf32, #tpu.memory_space<vmem>>, %arg6: memref<16x8xf32, #tpu.memory_space<vmem>>, %arg7: memref<1x8xf32, #tpu.memory_space<vmem>>, %arg8: memref<64x2xf32, #tpu.memory_space<vmem>>, %arg9: memref<1x64x8xf32, #tpu.memory_space<vmem>>, %arg10: memref<96x8xf32, #tpu.memory_space<vmem>>) attributes {dimension_semantics = [#tpu.dimension_semantics<parallel>], iteration_bounds = array<i64: 2>, scalar_prefetch = 0 : i64, scratch_operands = 1 : i64, tpu.core_type = #tpu.core_type<tc>, window_params = [{transform_indices = @transform_0, window_bounds = array<i64: 1, 64, 8>}, {pipeline_mode = #tpu.pipeline_mode<synchronous>, transform_indices = @transform_1, window_bounds = array<i64: 8, 8>}, {pipeline_mode = #tpu.pipeline_mode<synchronous>, transform_indices = @transform_2, window_bounds = array<i64: 27, 8>}, {pipeline_mode = #tpu.pipeline_mode<synchronous>, transform_indices = @transform_3, window_bounds = array<i64: 4, 8>}, {pipeline_mode = #tpu.pipeline_mode<synchronous>, transform_indices = @transform_4, window_bounds = array<i64: 4, 8>}, {pipeline_mode = #tpu.pipeline_mode<synchronous>, transform_indices = @transform_5, window_bounds = array<i64: 16, 8>}, {pipeline_mode = #tpu.pipeline_mode<synchronous>, transform_indices = @transform_6, window_bounds = array<i64: 1, 8>}, {pipeline_mode = #tpu.pipeline_mode<synchronous>, transform_indices = @transform_7, window_bounds = array<i64: 64, 2>}, {transform_indices = @transform_8, window_bounds = array<i64: 1, 64, 8>}]} {
    %c0 = arith.constant 0 : index
    %c0_0 = arith.constant 0 : index
    %c0_1 = arith.constant 0 : index
    %0 = vector.load %arg1[%c0, %c0_0, %c0_1] : memref<1x64x8xf32, #tpu.memory_space<vmem>>, vector<1x64x8xf32>
    %1 = vector.shape_cast %0 : vector<1x64x8xf32> to vector<64x8xf32>
    %c0_2 = arith.constant 0 : index
    %c0_3 = arith.constant 0 : index
    %2 = vector.load %arg3[%c0_2, %c0_3] : memref<27x8xf32, #tpu.memory_space<vmem>>, vector<27x8xf32>
    %c0_4 = arith.constant 0 : index
    %c0_5 = arith.constant 0 : index
    %3 = vector.load %arg4[%c0_4, %c0_5] : memref<4x8xf32, #tpu.memory_space<vmem>>, vector<4x8xf32>
    %c0_6 = arith.constant 0 : index
    %c0_7 = arith.constant 0 : index
    %4 = vector.load %arg5[%c0_6, %c0_7] : memref<4x8xf32, #tpu.memory_space<vmem>>, vector<4x8xf32>
    %c0_8 = arith.constant 0 : index
    %c0_9 = arith.constant 0 : index
    %5 = vector.load %arg8[%c0_8, %c0_9] : memref<64x2xf32, #tpu.memory_space<vmem>>, vector<64x1xf32>
    %c0_10 = arith.constant 0 : index
    %c1 = arith.constant 1 : index
    %6 = vector.load %arg8[%c0_10, %c1] : memref<64x2xf32, #tpu.memory_space<vmem>>, vector<64x1xf32>
    %cst = arith.constant 0.000000e+00 : f32
    %7 = vector.broadcast %cst : f32 to vector<16x8xf32>
    %c0_11 = arith.constant 0 : index
    %c0_12 = arith.constant 0 : index
    %8 = vector.load %arg10[%c0_11, %c0_12] : memref<96x8xf32, #tpu.memory_space<vmem>>, vector<16x8xf32>
    tpu.vector_store %arg10[%c0_11, %c0_12], %7 {strides = array<i32>} : memref<96x8xf32, #tpu.memory_space<vmem>>, vector<16x8xf32>,
    %cst_13 = arith.constant 0.000000e+00 : f32
    %9 = vector.broadcast %cst_13 : f32 to vector<16x8xf32>
    %c80 = arith.constant 80 : index
    %c0_14 = arith.constant 0 : index
    %10 = vector.load %arg10[%c80, %c0_14] : memref<96x8xf32, #tpu.memory_space<vmem>>, vector<16x8xf32>
    tpu.vector_store %arg10[%c80, %c0_14], %9 {strides = array<i32>} : memref<96x8xf32, #tpu.memory_space<vmem>>, vector<16x8xf32>,
    %c0_15 = arith.constant 0 : index
    %c0_16 = arith.constant 0 : index
    %11 = vector.load %arg2[%c0_15, %c0_16] : memref<8x8xf32, #tpu.memory_space<vmem>>, vector<8x8xf32>
    %cst_17 = arith.constant dense<0.000000e+00> : vector<64x8xf32>
    %12 = tpu.matmul %1, %11, %cst_17 {dimension_numbers = #tpu.dot_dimension_numbers<[1], [0], [0], [1], [0, 0, 1, 1], [], []>} : vector<64x8xf32>, vector<8x8xf32>, vector<64x8xf32> -> vector<64x8xf32>
    %13 = vector.shape_cast %12 : vector<64x8xf32> to vector<1x64x8xf32>
    %cst_18 = arith.constant dense<0.000000e+00> : vector<1xf32>
    %14 = vector.multi_reduction <add>, %13, %cst_18 [1, 2] : vector<1x64x8xf32> to vector<1xf32>
    %15 = vector.shape_cast %14 : vector<1xf32> to vector<1x1x1xf32>
    %16 = vector.extract %15[0, 0, 0] : f32 from vector<1x1x1xf32>
    %17 = arith.mulf %12, %12 : vector<64x8xf32>
    %18 = vector.shape_cast %17 : vector<64x8xf32> to vector<1x64x8xf32>
    %cst_19 = arith.constant dense<0.000000e+00> : vector<1xf32>
    %19 = vector.multi_reduction <add>, %18, %cst_19 [1, 2] : vector<1x64x8xf32> to vector<1xf32>
    %20 = vector.shape_cast %19 : vector<1xf32> to vector<1x1x1xf32>
    %21 = vector.extract %20[0, 0, 0] : f32 from vector<1x1x1xf32>
    %cst_20 = arith.constant 0.001953125 : f32
    %22 = arith.mulf %16, %cst_20 : f32
    %cst_21 = arith.constant 0.001953125 : f32
    %23 = arith.mulf %21, %cst_21 : f32
    %24 = arith.mulf %22, %22 : f32
    %25 = arith.subf %23, %24 : f32
    %cst_22 = arith.constant 9.99999974E-6 : f32
    %26 = arith.addf %25, %cst_22 : f32
    %27 = math.rsqrt %26 : f32
    %28 = vector.extract_strided_slice %3 {offsets = [0, 0], sizes = [1, 8], strides = [1, 1]} : vector<4x8xf32> to vector<1x8xf32>
    %29 = vector.broadcast %27 : f32 to vector<1x8xf32>
    %30 = arith.mulf %28, %29 : vector<1x8xf32>
    %31 = vector.extract_strided_slice %4 {offsets = [0, 0], sizes = [1, 8], strides = [1, 1]} : vector<4x8xf32> to vector<1x8xf32>
    %32 = vector.broadcast %22 : f32 to vector<1x8xf32>
    %33 = arith.mulf %32, %30 : vector<1x8xf32>
    %34 = arith.subf %31, %33 : vector<1x8xf32>
    %35 = vector.broadcast %30 : vector<1x8xf32> to vector<64x8xf32>
    %36 = arith.mulf %12, %35 : vector<64x8xf32>
    %37 = vector.broadcast %34 : vector<1x8xf32> to vector<64x8xf32>
    %38 = arith.addf %36, %37 : vector<64x8xf32>
    %c16 = arith.constant 16 : index
    %c0_23 = arith.constant 0 : index
    %39 = vector.load %arg10[%c16, %c0_23] : memref<96x8xf32, #tpu.memory_space<vmem>>, vector<64x8xf32>
    tpu.vector_store %arg10[%c16, %c0_23], %38 {strides = array<i32>} : memref<96x8xf32, #tpu.memory_space<vmem>>, vector<64x8xf32>,
    %40 = vector.extract_strided_slice %2 {offsets = [0, 0], sizes = [1, 8], strides = [1, 1]} : vector<27x8xf32> to vector<1x8xf32>
    %c7 = arith.constant 7 : index
    %c0_24 = arith.constant 0 : index
    %41 = vector.load %arg10[%c7, %c0_24] : memref<96x8xf32, #tpu.memory_space<vmem>>, vector<64x8xf32>
    %42 = vector.broadcast %40 : vector<1x8xf32> to vector<64x8xf32>
    %43 = arith.mulf %42, %41 : vector<64x8xf32>
    %44 = vector.broadcast %5 : vector<64x1xf32> to vector<64x8xf32>
    %45 = arith.mulf %43, %44 : vector<64x8xf32>
    %46 = vector.extract_strided_slice %2 {offsets = [1, 0], sizes = [1, 8], strides = [1, 1]} : vector<27x8xf32> to vector<1x8xf32>
    %c8 = arith.constant 8 : index
    %c0_25 = arith.constant 0 : index
    %47 = vector.load %arg10[%c8, %c0_25] : memref<96x8xf32, #tpu.memory_space<vmem>>, vector<64x8xf32>
    %48 = vector.broadcast %46 : vector<1x8xf32> to vector<64x8xf32>
    %49 = arith.mulf %48, %47 : vector<64x8xf32>
    %50 = arith.addf %45, %49 : vector<64x8xf32>
    %51 = vector.extract_strided_slice %2 {offsets = [2, 0], sizes = [1, 8], strides = [1, 1]} : vector<27x8xf32> to vector<1x8xf32>
    %c9 = arith.constant 9 : index
    %c0_26 = arith.constant 0 : index
    %52 = vector.load %arg10[%c9, %c0_26] : memref<96x8xf32, #tpu.memory_space<vmem>>, vector<64x8xf32>
    %53 = vector.broadcast %51 : vector<1x8xf32> to vector<64x8xf32>
    %54 = arith.mulf %53, %52 : vector<64x8xf32>
    %55 = vector.broadcast %6 : vector<64x1xf32> to vector<64x8xf32>
    %56 = arith.mulf %54, %55 : vector<64x8xf32>
    %57 = arith.addf %50, %56 : vector<64x8xf32>
    %58 = vector.extract_strided_slice %2 {offsets = [3, 0], sizes = [1, 8], strides = [1, 1]} : vector<27x8xf32> to vector<1x8xf32>
    %c15 = arith.constant 15 : index
    %c0_27 = arith.constant 0 : index
    %59 = vector.load %arg10[%c15, %c0_27] : memref<96x8xf32, #tpu.memory_space<vmem>>, vector<64x8xf32>
    %60 = vector.broadcast %58 : vector<1x8xf32> to vector<64x8xf32>
    %61 = arith.mulf %60, %59 : vector<64x8xf32>
    %62 = vector.broadcast %5 : vector<64x1xf32> to vector<64x8xf32>
    %63 = arith.mulf %61, %62 : vector<64x8xf32>
    %64 = arith.addf %57, %63 : vector<64x8xf32>
    %65 = vector.extract_strided_slice %2 {offsets = [4, 0], sizes = [1, 8], strides = [1, 1]} : vector<27x8xf32> to vector<1x8xf32>
    %c16_28 = arith.constant 16 : index
    %c0_29 = arith.constant 0 : index
    %66 = vector.load %arg10[%c16_28, %c0_29] : memref<96x8xf32, #tpu.memory_space<vmem>>, vector<64x8xf32>
    %67 = vector.broadcast %65 : vector<1x8xf32> to vector<64x8xf32>
    %68 = arith.mulf %67, %66 : vector<64x8xf32>
    %69 = arith.addf %64, %68 : vector<64x8xf32>
    %70 = vector.extract_strided_slice %2 {offsets = [5, 0], sizes = [1, 8], strides = [1, 1]} : vector<27x8xf32> to vector<1x8xf32>
    %c17 = arith.constant 17 : index
    %c0_30 = arith.constant 0 : index
    %71 = vector.load %arg10[%c17, %c0_30] : memref<96x8xf32, #tpu.memory_space<vmem>>, vector<64x8xf32>
    %72 = vector.broadcast %70 : vector<1x8xf32> to vector<64x8xf32>
    %73 = arith.mulf %72, %71 : vector<64x8xf32>
    %74 = vector.broadcast %6 : vector<64x1xf32> to vector<64x8xf32>
    %75 = arith.mulf %73, %74 : vector<64x8xf32>
    %76 = arith.addf %69, %75 : vector<64x8xf32>
    %77 = vector.extract_strided_slice %2 {offsets = [6, 0], sizes = [1, 8], strides = [1, 1]} : vector<27x8xf32> to vector<1x8xf32>
    %c23 = arith.constant 23 : index
    %c0_31 = arith.constant 0 : index
    %78 = vector.load %arg10[%c23, %c0_31] : memref<96x8xf32, #tpu.memory_space<vmem>>, vector<64x8xf32>
    %79 = vector.broadcast %77 : vector<1x8xf32> to vector<64x8xf32>
    %80 = arith.mulf %79, %78 : vector<64x8xf32>
    %81 = vector.broadcast %5 : vector<64x1xf32> to vector<64x8xf32>
    %82 = arith.mulf %80, %81 : vector<64x8xf32>
    %83 = arith.addf %76, %82 : vector<64x8xf32>
    %84 = vector.extract_strided_slice %2 {offsets = [7, 0], sizes = [1, 8], strides = [1, 1]} : vector<27x8xf32> to vector<1x8xf32>
    %c24 = arith.constant 24 : index
    %c0_32 = arith.constant 0 : index
    %85 = vector.load %arg10[%c24, %c0_32] : memref<96x8xf32, #tpu.memory_space<vmem>>, vector<64x8xf32>
    %86 = vector.broadcast %84 : vector<1x8xf32> to vector<64x8xf32>
    %87 = arith.mulf %86, %85 : vector<64x8xf32>
    %88 = arith.addf %83, %87 : vector<64x8xf32>
    %89 = vector.extract_strided_slice %2 {offsets = [8, 0], sizes = [1, 8], strides = [1, 1]} : vector<27x8xf32> to vector<1x8xf32>
    %c25 = arith.constant 25 : index
    %c0_33 = arith.constant 0 : index
    %90 = vector.load %arg10[%c25, %c0_33] : memref<96x8xf32, #tpu.memory_space<vmem>>, vector<64x8xf32>
    %91 = vector.broadcast %89 : vector<1x8xf32> to vector<64x8xf32>
    %92 = arith.mulf %91, %90 : vector<64x8xf32>
    %93 = vector.broadcast %6 : vector<64x1xf32> to vector<64x8xf32>
    %94 = arith.mulf %92, %93 : vector<64x8xf32>
    %95 = arith.addf %88, %94 : vector<64x8xf32>
    %96 = vector.shape_cast %95 : vector<64x8xf32> to vector<1x64x8xf32>
    %cst_34 = arith.constant dense<0.000000e+00> : vector<1xf32>
    %97 = vector.multi_reduction <add>, %96, %cst_34 [1, 2] : vector<1x64x8xf32> to vector<1xf32>
    %98 = vector.shape_cast %97 : vector<1xf32> to vector<1x1x1xf32>
    %99 = vector.extract %98[0, 0, 0] : f32 from vector<1x1x1xf32>
    %100 = arith.mulf %95, %95 : vector<64x8xf32>
    %101 = vector.shape_cast %100 : vector<64x8xf32> to vector<1x64x8xf32>
    %cst_35 = arith.constant dense<0.000000e+00> : vector<1xf32>
    %102 = vector.multi_reduction <add>, %101, %cst_35 [1, 2] : vector<1x64x8xf32> to vector<1xf32>
    %103 = vector.shape_cast %102 : vector<1xf32> to vector<1x1x1xf32>
    %104 = vector.extract %103[0, 0, 0] : f32 from vector<1x1x1xf32>
    %cst_36 = arith.constant 0.001953125 : f32
    %105 = arith.mulf %99, %cst_36 : f32
    %cst_37 = arith.constant 0.001953125 : f32
    %106 = arith.mulf %104, %cst_37 : f32
    %107 = arith.mulf %105, %105 : f32
    %108 = arith.subf %106, %107 : f32
    %cst_38 = arith.constant 9.99999974E-6 : f32
    %109 = arith.addf %108, %cst_38 : f32
    %110 = math.rsqrt %109 : f32
    %111 = vector.extract_strided_slice %3 {offsets = [1, 0], sizes = [1, 8], strides = [1, 1]} : vector<4x8xf32> to vector<1x8xf32>
    %112 = vector.broadcast %110 : f32 to vector<1x8xf32>
    %113 = arith.mulf %111, %112 : vector<1x8xf32>
    %114 = vector.extract_strided_slice %4 {offsets = [1, 0], sizes = [1, 8], strides = [1, 1]} : vector<4x8xf32> to vector<1x8xf32>
    %115 = vector.broadcast %105 : f32 to vector<1x8xf32>
    %116 = arith.mulf %115, %113 : vector<1x8xf32>
    %117 = arith.subf %114, %116 : vector<1x8xf32>
    %118 = vector.broadcast %113 : vector<1x8xf32> to vector<64x8xf32>
    %119 = arith.mulf %95, %118 : vector<64x8xf32>
    %120 = vector.broadcast %117 : vector<1x8xf32> to vector<64x8xf32>
    %121 = arith.addf %119, %120 : vector<64x8xf32>
    %cst_39 = arith.constant 3.000000e+00 : f32
    %122 = vector.broadcast %cst_39 : f32 to vector<64x8xf32>
    %123 = arith.addf %121, %122 : vector<64x8xf32>
    %cst_40 = arith.constant 0.000000e+00 : f32
    %cst_41 = arith.constant 6.000000e+00 : f32
    %124 = vector.broadcast %cst_40 : f32 to vector<64x8xf32>
    %125 = arith.maximumf %124, %123 : vector<64x8xf32>
    %126 = vector.broadcast %cst_41 : f32 to vector<64x8xf32>
    %127 = arith.minimumf %126, %125 : vector<64x8xf32>
    %128 = arith.mulf %121, %127 : vector<64x8xf32>
    %cst_42 = arith.constant 0.166666672 : f32
    %129 = vector.broadcast %cst_42 : f32 to vector<64x8xf32>
    %130 = arith.mulf %128, %129 : vector<64x8xf32>
    %c0_43 = arith.constant 0 : index
    %c0_44 = arith.constant 0 : index
    %131 = vector.load %arg6[%c0_43, %c0_44] : memref<16x8xf32, #tpu.memory_space<vmem>>, vector<8x8xf32>
    %cst_45 = arith.constant dense<0.000000e+00> : vector<64x8xf32>
    %132 = tpu.matmul %130, %131, %cst_45 {dimension_numbers = #tpu.dot_dimension_numbers<[1], [0], [0], [1], [0, 0, 1, 1], [], []>} : vector<64x8xf32>, vector<8x8xf32>, vector<64x8xf32> -> vector<64x8xf32>
    %c16_46 = arith.constant 16 : index
    %c0_47 = arith.constant 0 : index
    %133 = vector.load %arg10[%c16_46, %c0_47] : memref<96x8xf32, #tpu.memory_space<vmem>>, vector<64x8xf32>
    tpu.vector_store %arg10[%c16_46, %c0_47], %38 {strides = array<i32>} : memref<96x8xf32, #tpu.memory_space<vmem>>, vector<64x8xf32>,
    %134 = vector.extract_strided_slice %2 {offsets = [9, 0], sizes = [1, 8], strides = [1, 1]} : vector<27x8xf32> to vector<1x8xf32>
    %c7_48 = arith.constant 7 : index
    %c0_49 = arith.constant 0 : index
    %135 = vector.load %arg10[%c7_48, %c0_49] : memref<96x8xf32, #tpu.memory_space<vmem>>, vector<64x8xf32>
    %136 = vector.broadcast %134 : vector<1x8xf32> to vector<64x8xf32>
    %137 = arith.mulf %136, %135 : vector<64x8xf32>
    %138 = vector.broadcast %5 : vector<64x1xf32> to vector<64x8xf32>
    %139 = arith.mulf %137, %138 : vector<64x8xf32>
    %140 = vector.extract_strided_slice %2 {offsets = [10, 0], sizes = [1, 8], strides = [1, 1]} : vector<27x8xf32> to vector<1x8xf32>
    %c8_50 = arith.constant 8 : index
    %c0_51 = arith.constant 0 : index
    %141 = vector.load %arg10[%c8_50, %c0_51] : memref<96x8xf32, #tpu.memory_space<vmem>>, vector<64x8xf32>
    %142 = vector.broadcast %140 : vector<1x8xf32> to vector<64x8xf32>
    %143 = arith.mulf %142, %141 : vector<64x8xf32>
    %144 = arith.addf %139, %143 : vector<64x8xf32>
    %145 = vector.extract_strided_slice %2 {offsets = [11, 0], sizes = [1, 8], strides = [1, 1]} : vector<27x8xf32> to vector<1x8xf32>
    %c9_52 = arith.constant 9 : index
    %c0_53 = arith.constant 0 : index
    %146 = vector.load %arg10[%c9_52, %c0_53] : memref<96x8xf32, #tpu.memory_space<vmem>>, vector<64x8xf32>
    %147 = vector.broadcast %145 : vector<1x8xf32> to vector<64x8xf32>
    %148 = arith.mulf %147, %146 : vector<64x8xf32>
    %149 = vector.broadcast %6 : vector<64x1xf32> to vector<64x8xf32>
    %150 = arith.mulf %148, %149 : vector<64x8xf32>
    %151 = arith.addf %144, %150 : vector<64x8xf32>
    %152 = vector.extract_strided_slice %2 {offsets = [12, 0], sizes = [1, 8], strides = [1, 1]} : vector<27x8xf32> to vector<1x8xf32>
    %c15_54 = arith.constant 15 : index
    %c0_55 = arith.constant 0 : index
    %153 = vector.load %arg10[%c15_54, %c0_55] : memref<96x8xf32, #tpu.memory_space<vmem>>, vector<64x8xf32>
    %154 = vector.broadcast %152 : vector<1x8xf32> to vector<64x8xf32>
    %155 = arith.mulf %154, %153 : vector<64x8xf32>
    %156 = vector.broadcast %5 : vector<64x1xf32> to vector<64x8xf32>
    %157 = arith.mulf %155, %156 : vector<64x8xf32>
    %158 = arith.addf %151, %157 : vector<64x8xf32>
    %159 = vector.extract_strided_slice %2 {offsets = [13, 0], sizes = [1, 8], strides = [1, 1]} : vector<27x8xf32> to vector<1x8xf32>
    %c16_56 = arith.constant 16 : index
    %c0_57 = arith.constant 0 : index
    %160 = vector.load %arg10[%c16_56, %c0_57] : memref<96x8xf32, #tpu.memory_space<vmem>>, vector<64x8xf32>
    %161 = vector.broadcast %159 : vector<1x8xf32> to vector<64x8xf32>
    %162 = arith.mulf %161, %160 : vector<64x8xf32>
    %163 = arith.addf %158, %162 : vector<64x8xf32>
    %164 = vector.extract_strided_slice %2 {offsets = [14, 0], sizes = [1, 8], strides = [1, 1]} : vector<27x8xf32> to vector<1x8xf32>
    %c17_58 = arith.constant 17 : index
    %c0_59 = arith.constant 0 : index
    %165 = vector.load %arg10[%c17_58, %c0_59] : memref<96x8xf32, #tpu.memory_space<vmem>>, vector<64x8xf32>
    %166 = vector.broadcast %164 : vector<1x8xf32> to vector<64x8xf32>
    %167 = arith.mulf %166, %165 : vector<64x8xf32>
    %168 = vector.broadcast %6 : vector<64x1xf32> to vector<64x8xf32>
    %169 = arith.mulf %167, %168 : vector<64x8xf32>
    %170 = arith.addf %163, %169 : vector<64x8xf32>
    %171 = vector.extract_strided_slice %2 {offsets = [15, 0], sizes = [1, 8], strides = [1, 1]} : vector<27x8xf32> to vector<1x8xf32>
    %c23_60 = arith.constant 23 : index
    %c0_61 = arith.constant 0 : index
    %172 = vector.load %arg10[%c23_60, %c0_61] : memref<96x8xf32, #tpu.memory_space<vmem>>, vector<64x8xf32>
    %173 = vector.broadcast %171 : vector<1x8xf32> to vector<64x8xf32>
    %174 = arith.mulf %173, %172 : vector<64x8xf32>
    %175 = vector.broadcast %5 : vector<64x1xf32> to vector<64x8xf32>
    %176 = arith.mulf %174, %175 : vector<64x8xf32>
    %177 = arith.addf %170, %176 : vector<64x8xf32>
    %178 = vector.extract_strided_slice %2 {offsets = [16, 0], sizes = [1, 8], strides = [1, 1]} : vector<27x8xf32> to vector<1x8xf32>
    %c24_62 = arith.constant 24 : index
    %c0_63 = arith.constant 0 : index
    %179 = vector.load %arg10[%c24_62, %c0_63] : memref<96x8xf32, #tpu.memory_space<vmem>>, vector<64x8xf32>
    %180 = vector.broadcast %178 : vector<1x8xf32> to vector<64x8xf32>
    %181 = arith.mulf %180, %179 : vector<64x8xf32>
    %182 = arith.addf %177, %181 : vector<64x8xf32>
    %183 = vector.extract_strided_slice %2 {offsets = [17, 0], sizes = [1, 8], strides = [1, 1]} : vector<27x8xf32> to vector<1x8xf32>
    %c25_64 = arith.constant 25 : index
    %c0_65 = arith.constant 0 : index
    %184 = vector.load %arg10[%c25_64, %c0_65] : memref<96x8xf32, #tpu.memory_space<vmem>>, vector<64x8xf32>
    %185 = vector.broadcast %183 : vector<1x8xf32> to vector<64x8xf32>
    %186 = arith.mulf %185, %184 : vector<64x8xf32>
    %187 = vector.broadcast %6 : vector<64x1xf32> to vector<64x8xf32>
    %188 = arith.mulf %186, %187 : vector<64x8xf32>
    %189 = arith.addf %182, %188 : vector<64x8xf32>
    %190 = vector.shape_cast %189 : vector<64x8xf32> to vector<1x64x8xf32>
    %cst_66 = arith.constant dense<0.000000e+00> : vector<1xf32>
    %191 = vector.multi_reduction <add>, %190, %cst_66 [1, 2] : vector<1x64x8xf32> to vector<1xf32>
    %192 = vector.shape_cast %191 : vector<1xf32> to vector<1x1x1xf32>
    %193 = vector.extract %192[0, 0, 0] : f32 from vector<1x1x1xf32>
    %194 = arith.mulf %189, %189 : vector<64x8xf32>
    %195 = vector.shape_cast %194 : vector<64x8xf32> to vector<1x64x8xf32>
    %cst_67 = arith.constant dense<0.000000e+00> : vector<1xf32>
    %196 = vector.multi_reduction <add>, %195, %cst_67 [1, 2] : vector<1x64x8xf32> to vector<1xf32>
    %197 = vector.shape_cast %196 : vector<1xf32> to vector<1x1x1xf32>
    %198 = vector.extract %197[0, 0, 0] : f32 from vector<1x1x1xf32>
    %cst_68 = arith.constant 0.001953125 : f32
    %199 = arith.mulf %193, %cst_68 : f32
    %cst_69 = arith.constant 0.001953125 : f32
    %200 = arith.mulf %198, %cst_69 : f32
    %201 = arith.mulf %199, %199 : f32
    %202 = arith.subf %200, %201 : f32
    %cst_70 = arith.constant 9.99999974E-6 : f32
    %203 = arith.addf %202, %cst_70 : f32
    %204 = math.rsqrt %203 : f32
    %205 = vector.extract_strided_slice %3 {offsets = [2, 0], sizes = [1, 8], strides = [1, 1]} : vector<4x8xf32> to vector<1x8xf32>
    %206 = vector.broadcast %204 : f32 to vector<1x8xf32>
    %207 = arith.mulf %205, %206 : vector<1x8xf32>
    %208 = vector.extract_strided_slice %4 {offsets = [2, 0], sizes = [1, 8], strides = [1, 1]} : vector<4x8xf32> to vector<1x8xf32>
    %209 = vector.broadcast %199 : f32 to vector<1x8xf32>
    %210 = arith.mulf %209, %207 : vector<1x8xf32>
    %211 = arith.subf %208, %210 : vector<1x8xf32>
    %212 = vector.broadcast %207 : vector<1x8xf32> to vector<64x8xf32>
    %213 = arith.mulf %189, %212 : vector<64x8xf32>
    %214 = vector.broadcast %211 : vector<1x8xf32> to vector<64x8xf32>
    %215 = arith.addf %213, %214 : vector<64x8xf32>
    %c16_71 = arith.constant 16 : index
    %c0_72 = arith.constant 0 : index
    %216 = vector.load %arg10[%c16_71, %c0_72] : memref<96x8xf32, #tpu.memory_space<vmem>>, vector<64x8xf32>
    tpu.vector_store %arg10[%c16_71, %c0_72], %215 {strides = array<i32>} : memref<96x8xf32, #tpu.memory_space<vmem>>, vector<64x8xf32>,
    %217 = vector.extract_strided_slice %2 {offsets = [18, 0], sizes = [1, 8], strides = [1, 1]} : vector<27x8xf32> to vector<1x8xf32>
    %c7_73 = arith.constant 7 : index
    %c0_74 = arith.constant 0 : index
    %218 = vector.load %arg10[%c7_73, %c0_74] : memref<96x8xf32, #tpu.memory_space<vmem>>, vector<64x8xf32>
    %219 = vector.broadcast %217 : vector<1x8xf32> to vector<64x8xf32>
    %220 = arith.mulf %219, %218 : vector<64x8xf32>
    %221 = vector.broadcast %5 : vector<64x1xf32> to vector<64x8xf32>
    %222 = arith.mulf %220, %221 : vector<64x8xf32>
    %223 = vector.extract_strided_slice %2 {offsets = [19, 0], sizes = [1, 8], strides = [1, 1]} : vector<27x8xf32> to vector<1x8xf32>
    %c8_75 = arith.constant 8 : index
    %c0_76 = arith.constant 0 : index
    %224 = vector.load %arg10[%c8_75, %c0_76] : memref<96x8xf32, #tpu.memory_space<vmem>>, vector<64x8xf32>
    %225 = vector.broadcast %223 : vector<1x8xf32> to vector<64x8xf32>
    %226 = arith.mulf %225, %224 : vector<64x8xf32>
    %227 = arith.addf %222, %226 : vector<64x8xf32>
    %228 = vector.extract_strided_slice %2 {offsets = [20, 0], sizes = [1, 8], strides = [1, 1]} : vector<27x8xf32> to vector<1x8xf32>
    %c9_77 = arith.constant 9 : index
    %c0_78 = arith.constant 0 : index
    %229 = vector.load %arg10[%c9_77, %c0_78] : memref<96x8xf32, #tpu.memory_space<vmem>>, vector<64x8xf32>
    %230 = vector.broadcast %228 : vector<1x8xf32> to vector<64x8xf32>
    %231 = arith.mulf %230, %229 : vector<64x8xf32>
    %232 = vector.broadcast %6 : vector<64x1xf32> to vector<64x8xf32>
    %233 = arith.mulf %231, %232 : vector<64x8xf32>
    %234 = arith.addf %227, %233 : vector<64x8xf32>
    %235 = vector.extract_strided_slice %2 {offsets = [21, 0], sizes = [1, 8], strides = [1, 1]} : vector<27x8xf32> to vector<1x8xf32>
    %c15_79 = arith.constant 15 : index
    %c0_80 = arith.constant 0 : index
    %236 = vector.load %arg10[%c15_79, %c0_80] : memref<96x8xf32, #tpu.memory_space<vmem>>, vector<64x8xf32>
    %237 = vector.broadcast %235 : vector<1x8xf32> to vector<64x8xf32>
    %238 = arith.mulf %237, %236 : vector<64x8xf32>
    %239 = vector.broadcast %5 : vector<64x1xf32> to vector<64x8xf32>
    %240 = arith.mulf %238, %239 : vector<64x8xf32>
    %241 = arith.addf %234, %240 : vector<64x8xf32>
    %242 = vector.extract_strided_slice %2 {offsets = [22, 0], sizes = [1, 8], strides = [1, 1]} : vector<27x8xf32> to vector<1x8xf32>
    %c16_81 = arith.constant 16 : index
    %c0_82 = arith.constant 0 : index
    %243 = vector.load %arg10[%c16_81, %c0_82] : memref<96x8xf32, #tpu.memory_space<vmem>>, vector<64x8xf32>
    %244 = vector.broadcast %242 : vector<1x8xf32> to vector<64x8xf32>
    %245 = arith.mulf %244, %243 : vector<64x8xf32>
    %246 = arith.addf %241, %245 : vector<64x8xf32>
    %247 = vector.extract_strided_slice %2 {offsets = [23, 0], sizes = [1, 8], strides = [1, 1]} : vector<27x8xf32> to vector<1x8xf32>
    %c17_83 = arith.constant 17 : index
    %c0_84 = arith.constant 0 : index
    %248 = vector.load %arg10[%c17_83, %c0_84] : memref<96x8xf32, #tpu.memory_space<vmem>>, vector<64x8xf32>
    %249 = vector.broadcast %247 : vector<1x8xf32> to vector<64x8xf32>
    %250 = arith.mulf %249, %248 : vector<64x8xf32>
    %251 = vector.broadcast %6 : vector<64x1xf32> to vector<64x8xf32>
    %252 = arith.mulf %250, %251 : vector<64x8xf32>
    %253 = arith.addf %246, %252 : vector<64x8xf32>
    %254 = vector.extract_strided_slice %2 {offsets = [24, 0], sizes = [1, 8], strides = [1, 1]} : vector<27x8xf32> to vector<1x8xf32>
    %c23_85 = arith.constant 23 : index
    %c0_86 = arith.constant 0 : index
    %255 = vector.load %arg10[%c23_85, %c0_86] : memref<96x8xf32, #tpu.memory_space<vmem>>, vector<64x8xf32>
    %256 = vector.broadcast %254 : vector<1x8xf32> to vector<64x8xf32>
    %257 = arith.mulf %256, %255 : vector<64x8xf32>
    %258 = vector.broadcast %5 : vector<64x1xf32> to vector<64x8xf32>
    %259 = arith.mulf %257, %258 : vector<64x8xf32>
    %260 = arith.addf %253, %259 : vector<64x8xf32>
    %261 = vector.extract_strided_slice %2 {offsets = [25, 0], sizes = [1, 8], strides = [1, 1]} : vector<27x8xf32> to vector<1x8xf32>
    %c24_87 = arith.constant 24 : index
    %c0_88 = arith.constant 0 : index
    %262 = vector.load %arg10[%c24_87, %c0_88] : memref<96x8xf32, #tpu.memory_space<vmem>>, vector<64x8xf32>
    %263 = vector.broadcast %261 : vector<1x8xf32> to vector<64x8xf32>
    %264 = arith.mulf %263, %262 : vector<64x8xf32>
    %265 = arith.addf %260, %264 : vector<64x8xf32>
    %266 = vector.extract_strided_slice %2 {offsets = [26, 0], sizes = [1, 8], strides = [1, 1]} : vector<27x8xf32> to vector<1x8xf32>
    %c25_89 = arith.constant 25 : index
    %c0_90 = arith.constant 0 : index
    %267 = vector.load %arg10[%c25_89, %c0_90] : memref<96x8xf32, #tpu.memory_space<vmem>>, vector<64x8xf32>
    %268 = vector.broadcast %266 : vector<1x8xf32> to vector<64x8xf32>
    %269 = arith.mulf %268, %267 : vector<64x8xf32>
    %270 = vector.broadcast %6 : vector<64x1xf32> to vector<64x8xf32>
    %271 = arith.mulf %269, %270 : vector<64x8xf32>
    %272 = arith.addf %265, %271 : vector<64x8xf32>
    %273 = vector.shape_cast %272 : vector<64x8xf32> to vector<1x64x8xf32>
    %cst_91 = arith.constant dense<0.000000e+00> : vector<1xf32>
    %274 = vector.multi_reduction <add>, %273, %cst_91 [1, 2] : vector<1x64x8xf32> to vector<1xf32>
    %275 = vector.shape_cast %274 : vector<1xf32> to vector<1x1x1xf32>
    %276 = vector.extract %275[0, 0, 0] : f32 from vector<1x1x1xf32>
    %277 = arith.mulf %272, %272 : vector<64x8xf32>
    %278 = vector.shape_cast %277 : vector<64x8xf32> to vector<1x64x8xf32>
    %cst_92 = arith.constant dense<0.000000e+00> : vector<1xf32>
    %279 = vector.multi_reduction <add>, %278, %cst_92 [1, 2] : vector<1x64x8xf32> to vector<1xf32>
    %280 = vector.shape_cast %279 : vector<1xf32> to vector<1x1x1xf32>
    %281 = vector.extract %280[0, 0, 0] : f32 from vector<1x1x1xf32>
    %cst_93 = arith.constant 0.001953125 : f32
    %282 = arith.mulf %276, %cst_93 : f32
    %cst_94 = arith.constant 0.001953125 : f32
    %283 = arith.mulf %281, %cst_94 : f32
    %284 = arith.mulf %282, %282 : f32
    %285 = arith.subf %283, %284 : f32
    %cst_95 = arith.constant 9.99999974E-6 : f32
    %286 = arith.addf %285, %cst_95 : f32
    %287 = math.rsqrt %286 : f32
    %288 = vector.extract_strided_slice %3 {offsets = [3, 0], sizes = [1, 8], strides = [1, 1]} : vector<4x8xf32> to vector<1x8xf32>
    %289 = vector.broadcast %287 : f32 to vector<1x8xf32>
    %290 = arith.mulf %288, %289 : vector<1x8xf32>
    %291 = vector.extract_strided_slice %4 {offsets = [3, 0], sizes = [1, 8], strides = [1, 1]} : vector<4x8xf32> to vector<1x8xf32>
    %292 = vector.broadcast %282 : f32 to vector<1x8xf32>
    %293 = arith.mulf %292, %290 : vector<1x8xf32>
    %294 = arith.subf %291, %293 : vector<1x8xf32>
    %295 = vector.broadcast %290 : vector<1x8xf32> to vector<64x8xf32>
    %296 = arith.mulf %272, %295 : vector<64x8xf32>
    %297 = vector.broadcast %294 : vector<1x8xf32> to vector<64x8xf32>
    %298 = arith.addf %296, %297 : vector<64x8xf32>
    %cst_96 = arith.constant 3.000000e+00 : f32
    %299 = vector.broadcast %cst_96 : f32 to vector<64x8xf32>
    %300 = arith.addf %298, %299 : vector<64x8xf32>
    %cst_97 = arith.constant 0.000000e+00 : f32
    %cst_98 = arith.constant 6.000000e+00 : f32
    %301 = vector.broadcast %cst_97 : f32 to vector<64x8xf32>
    %302 = arith.maximumf %301, %300 : vector<64x8xf32>
    %303 = vector.broadcast %cst_98 : f32 to vector<64x8xf32>
    %304 = arith.minimumf %303, %302 : vector<64x8xf32>
    %305 = arith.mulf %298, %304 : vector<64x8xf32>
    %cst_99 = arith.constant 0.166666672 : f32
    %306 = vector.broadcast %cst_99 : f32 to vector<64x8xf32>
    %307 = arith.mulf %305, %306 : vector<64x8xf32>
    %c8_100 = arith.constant 8 : index
    %c0_101 = arith.constant 0 : index
    %308 = vector.load %arg6[%c8_100, %c0_101] : memref<16x8xf32, #tpu.memory_space<vmem>>, vector<8x8xf32>
    %cst_102 = arith.constant dense<0.000000e+00> : vector<64x8xf32>
    %309 = tpu.matmul %307, %308, %cst_102 {dimension_numbers = #tpu.dot_dimension_numbers<[1], [0], [0], [1], [0, 0, 1, 1], [], []>} : vector<64x8xf32>, vector<8x8xf32>, vector<64x8xf32> -> vector<64x8xf32>
    %310 = arith.addf %132, %309 : vector<64x8xf32>
    %c0_103 = arith.constant 0 : index
    %c0_104 = arith.constant 0 : index
    %311 = vector.load %arg7[%c0_103, %c0_104] : memref<1x8xf32, #tpu.memory_space<vmem>>, vector<1x8xf32>
    %312 = vector.broadcast %311 : vector<1x8xf32> to vector<64x8xf32>
    %313 = arith.addf %310, %312 : vector<64x8xf32>
    %c0_105 = arith.constant 0 : index
    %c0_106 = arith.constant 0 : index
    %c0_107 = arith.constant 0 : index
    %314 = vector.load %arg9[%c0_105, %c0_106, %c0_107] : memref<1x64x8xf32, #tpu.memory_space<vmem>>, vector<1x64x8xf32>
    %315 = vector.shape_cast %314 : vector<1x64x8xf32> to vector<64x8xf32>
    %316 = vector.shape_cast %313 : vector<64x8xf32> to vector<1x64x8xf32>
    tpu.vector_store %arg9[%c0_105, %c0_106, %c0_107], %316 {strides = array<i32>} : memref<1x64x8xf32, #tpu.memory_space<vmem>>, vector<1x64x8xf32>,
    return
  }
  func.func @transform_0(%arg0: i32) -> (i32, i32, i32) {
    %c0_i32 = arith.constant 0 : i32
    %c0_i32_0 = arith.constant 0 : i32
    %c0_i32_1 = arith.constant 0 : i32
    return %arg0, %c0_i32, %c0_i32_0 : i32, i32, i32
  }
  func.func @transform_1(%arg0: i32) -> (i32, i32) {
    %c0_i32 = arith.constant 0 : i32
    %c0_i32_0 = arith.constant 0 : i32
    %c0_i32_1 = arith.constant 0 : i32
    return %c0_i32, %c0_i32_0 : i32, i32
  }
  func.func @transform_2(%arg0: i32) -> (i32, i32) {
    %c0_i32 = arith.constant 0 : i32
    %c0_i32_0 = arith.constant 0 : i32
    %c0_i32_1 = arith.constant 0 : i32
    return %c0_i32, %c0_i32_0 : i32, i32
  }
  func.func @transform_3(%arg0: i32) -> (i32, i32) {
    %c0_i32 = arith.constant 0 : i32
    %c0_i32_0 = arith.constant 0 : i32
    %c0_i32_1 = arith.constant 0 : i32
    return %c0_i32, %c0_i32_0 : i32, i32
  }
  func.func @transform_4(%arg0: i32) -> (i32, i32) {
    %c0_i32 = arith.constant 0 : i32
    %c0_i32_0 = arith.constant 0 : i32
    %c0_i32_1 = arith.constant 0 : i32
    return %c0_i32, %c0_i32_0 : i32, i32
  }
  func.func @transform_5(%arg0: i32) -> (i32, i32) {
    %c0_i32 = arith.constant 0 : i32
    %c0_i32_0 = arith.constant 0 : i32
    %c0_i32_1 = arith.constant 0 : i32
    return %c0_i32, %c0_i32_0 : i32, i32
  }
  func.func @transform_6(%arg0: i32) -> (i32, i32) {
    %c0_i32 = arith.constant 0 : i32
    %c0_i32_0 = arith.constant 0 : i32
    %c0_i32_1 = arith.constant 0 : i32
    return %c0_i32, %c0_i32_0 : i32, i32
  }
  func.func @transform_7(%arg0: i32) -> (i32, i32) {
    %c0_i32 = arith.constant 0 : i32
    %c0_i32_0 = arith.constant 0 : i32
    %c0_i32_1 = arith.constant 0 : i32
    return %c0_i32, %c0_i32_0 : i32, i32
  }
  func.func @transform_8(%arg0: i32) -> (i32, i32, i32) {
    %c0_i32 = arith.constant 0 : i32
    %c0_i32_0 = arith.constant 0 : i32
    %c0_i32_1 = arith.constant 0 : i32
    return %arg0, %c0_i32, %c0_i32_0 : i32, i32, i32
  }
}

</mosaic_0001>

<llo_original>
// kernel: tpu_custom_call.1
$region0: #{tpu_custom_call.1}
  #allocation0 [shape = 'u32[]', space=smem, size = 0x4, offset = 0x4, fixed_abs, tag = 'smem constant byte address 0x4 - core index']
  #allocation1 [shape = 'u32[144,128]{1,0:T(1,128)}', space=vmem, size = 0x12000, scoped, tag = 'internal scratch']
  #allocation2 [shape = 'f32[96,8]{1,0:T(8,128)}', space=vmem, size = 0xc000, scoped, tag = 'scratch operand']
  %s0 = inlined_call_operand.vmem [shape: f32[2,64,8], index: 0, kind: input, shape index: {}]
  %s1 = inlined_call_operand.vmem [shape: f32[8,8], index: 1, kind: input, shape index: {}]
  %s2 = inlined_call_operand.vmem [shape: f32[27,8], index: 2, kind: input, shape index: {}]
  %s3 = inlined_call_operand.vmem [shape: f32[4,8], index: 3, kind: input, shape index: {}]
  %s4 = inlined_call_operand.vmem [shape: f32[4,8], index: 4, kind: input, shape index: {}]
  %s5 = inlined_call_operand.vmem [shape: f32[16,8], index: 5, kind: input, shape index: {}]
  %s6 = inlined_call_operand.vmem [shape: f32[1,8], index: 6, kind: input, shape index: {}]
  %s7 = inlined_call_operand.vmem [shape: f32[64,2], index: 7, kind: input, shape index: {}]
  %s8 = inlined_call_operand.vmem [shape: f32[2,64,8], index: 8, kind: output, shape index: {}]
  %s9 = sld [smem:[#allocation0]]
  $region65: #{tpu_custom_call.1} parent=0
    _
  %s11 = ssub.s32 1, %s9
  %s12 = scalar_select 0, %s11, %s9
  loop: start=0, step=1, limit=4
  $region2: #{tpu_custom_call.1} parent=0 // loop_pre_header
    _
  $region3: #{tpu_custom_call.1} parent=0 // loop_header
    %s14 = sphi 0, %s18
    %p15 = scmp.ge.s32.totalorder %s14, 4
    %s24 = sphi 0, %s26
    %s27 = sphi 0, %s24
    %s28 = sphi 0, %s27
    %s44 = sphi 0, %s28
    %s48 = sphi 0, %s48
    %s50 = sphi 0, %s48
    %s51 = sphi 0, %s50
    %s65 = sphi 0, %s51
    %s69 = sphi 0, %s69
    %s71 = sphi 0, %s69
    %s72 = sphi 0, %s71
    %s86 = sphi 0, %s72
    %s90 = sphi 0, %s90
    %s92 = sphi 0, %s90
    %s93 = sphi 0, %s92
    %s107 = sphi 0, %s93
    %s111 = sphi 0, %s111
    %s113 = sphi 0, %s111
    %s114 = sphi 0, %s113
    %s128 = sphi 0, %s114
    %s132 = sphi 0, %s132
    %s134 = sphi 0, %s132
    %s135 = sphi 0, %s134
    %s149 = sphi 0, %s135
    %s153 = sphi 0, %s153
    %s155 = sphi 0, %s153
    %s156 = sphi 0, %s155
    %s170 = sphi 0, %s156
    %s174 = sphi 0, %s174
    %s176 = sphi 0, %s174
    %s177 = sphi 0, %s176
    %s191 = sphi 0, %s177
    %s197 = sphi 0, %s199
    %s200 = sphi 0, %s197
    %s201 = sphi 0, %s200
    %s217 = sphi 0, %s201
  $region4: #{tpu_custom_call.1} parent=0 // loop_header_branch
    %17 = sbr.rel (%p15) target = $region8
  $region5: #{tpu_custom_call.1} parent=0 // loop_body
    %s19 = ssub.s32 %s14, 1
    %s20 = ssub.s32 %s14, 2
    %s21 = sadd.s32 %s14, 1
    %s22 = ssub.s32 %s14, %s21
    %p23 = scmp.eq.s32.totalorder %s22, 0
    %s25 = sadd.s32 %s24, 1
    %s26 = scalar_select %p23, %s24, %s25
    %p29 = pneg %p23
    %p30 = scmp.eq.s32.totalorder %s14, 1
    %p31 = por %p29, %p30
    %p32 = scmp.ne.s32.totalorder %s24, %s27
    %p33 = scmp.eq.s32.totalorder %s14, 0
    %p34 = por %p32, %p33
    %p35 = scmp.ne.s32.totalorder %s24, %s27
    %p36 = scmp.eq.s32.totalorder %s19, 1
    %p37 = por %p35, %p36
    %p38 = scmp.ne.s32.totalorder %s27, %s28
    %p39 = scmp.eq.s32.totalorder %s19, 0
    %p40 = por %p38, %p39
    %p41 = scmp.ne.s32.totalorder %s27, %s28
    %p42 = scmp.eq.s32.totalorder %s20, 1
    %p43 = por %p41, %p42
    %p45 = scmp.ne.s32.totalorder %s28, %s44
    %p46 = scmp.eq.s32.totalorder %s20, 0
    %p47 = por %p45, %p46
    %s49 = sadd.s32 %s48, 1
    %p52 = scmp.eq.s32.totalorder %s14, 1
    %p53 = scmp.ne.s32.totalorder %s48, %s50
    %p54 = scmp.eq.s32.totalorder %s14, 0
    %p55 = por %p53, %p54
    %p56 = scmp.ne.s32.totalorder %s48, %s50
    %p57 = scmp.eq.s32.totalorder %s19, 1
    %p58 = por %p56, %p57
    %p59 = scmp.ne.s32.totalorder %s50, %s51
    %p60 = scmp.eq.s32.totalorder %s19, 0
    %p61 = por %p59, %p60
    %p62 = scmp.ne.s32.totalorder %s50, %s51
    %p63 = scmp.eq.s32.totalorder %s20, 1
    %p64 = por %p62, %p63
    %p66 = scmp.ne.s32.totalorder %s51, %s65
    %p67 = scmp.eq.s32.totalorder %s20, 0
    %p68 = por %p66, %p67
    %s70 = sadd.s32 %s69, 1
    %p73 = scmp.eq.s32.totalorder %s14, 1
    %p74 = scmp.ne.s32.totalorder %s69, %s71
    %p75 = scmp.eq.s32.totalorder %s14, 0
    %p76 = por %p74, %p75
    %p77 = scmp.ne.s32.totalorder %s69, %s71
    %p78 = scmp.eq.s32.totalorder %s19, 1
    %p79 = por %p77, %p78
    %p80 = scmp.ne.s32.totalorder %s71, %s72
    %p81 = scmp.eq.s32.totalorder %s19, 0
    %p82 = por %p80, %p81
    %p83 = scmp.ne.s32.totalorder %s71, %s72
    %p84 = scmp.eq.s32.totalorder %s20, 1
    %p85 = por %p83, %p84
    %p87 = scmp.ne.s32.totalorder %s72, %s86
    %p88 = scmp.eq.s32.totalorder %s20, 0
    %p89 = por %p87, %p88
    %s91 = sadd.s32 %s90, 1
    %p94 = scmp.eq.s32.totalorder %s14, 1
    %p95 = scmp.ne.s32.totalorder %s90, %s92
    %p96 = scmp.eq.s32.totalorder %s14, 0
    %p97 = por %p95, %p96
    %p98 = scmp.ne.s32.totalorder %s90, %s92
    %p99 = scmp.eq.s32.totalorder %s19, 1
    %p100 = por %p98, %p99
    %p101 = scmp.ne.s32.totalorder %s92, %s93
    %p102 = scmp.eq.s32.totalorder %s19, 0
    %p103 = por %p101, %p102
    %p104 = scmp.ne.s32.totalorder %s92, %s93
    %p105 = scmp.eq.s32.totalorder %s20, 1
    %p106 = por %p104, %p105
    %p108 = scmp.ne.s32.totalorder %s93, %s107
    %p109 = scmp.eq.s32.totalorder %s20, 0
    %p110 = por %p108, %p109
    %s112 = sadd.s32 %s111, 1
    %p115 = scmp.eq.s32.totalorder %s14, 1
    %p116 = scmp.ne.s32.totalorder %s111, %s113
    %p117 = scmp.eq.s32.totalorder %s14, 0
    %p118 = por %p116, %p117
    %p119 = scmp.ne.s32.totalorder %s111, %s113
    %p120 = scmp.eq.s32.totalorder %s19, 1
    %p121 = por %p119, %p120
    %p122 = scmp.ne.s32.totalorder %s113, %s114
    %p123 = scmp.eq.s32.totalorder %s19, 0
    %p124 = por %p122, %p123
    %p125 = scmp.ne.s32.totalorder %s113, %s114
    %p126 = scmp.eq.s32.totalorder %s20, 1
    %p127 = por %p125, %p126
    %p129 = scmp.ne.s32.totalorder %s114, %s128
    %p130 = scmp.eq.s32.totalorder %s20, 0
    %p131 = por %p129, %p130
    %s133 = sadd.s32 %s132, 1
    %p136 = scmp.eq.s32.totalorder %s14, 1
    %p137 = scmp.ne.s32.totalorder %s132, %s134
    %p138 = scmp.eq.s32.totalorder %s14, 0
    %p139 = por %p137, %p138
    %p140 = scmp.ne.s32.totalorder %s132, %s134
    %p141 = scmp.eq.s32.totalorder %s19, 1
    %p142 = por %p140, %p141
    %p143 = scmp.ne.s32.totalorder %s134, %s135
    %p144 = scmp.eq.s32.totalorder %s19, 0
    %p145 = por %p143, %p144
    %p146 = scmp.ne.s32.totalorder %s134, %s135
    %p147 = scmp.eq.s32.totalorder %s20, 1
    %p148 = por %p146, %p147
    %p150 = scmp.ne.s32.totalorder %s135, %s149
    %p151 = scmp.eq.s32.totalorder %s20, 0
    %p152 = por %p150, %p151
    %s154 = sadd.s32 %s153, 1
    %p157 = scmp.eq.s32.totalorder %s14, 1
    %p158 = scmp.ne.s32.totalorder %s153, %s155
    %p159 = scmp.eq.s32.totalorder %s14, 0
    %p160 = por %p158, %p159
    %p161 = scmp.ne.s32.totalorder %s153, %s155
    %p162 = scmp.eq.s32.totalorder %s19, 1
    %p163 = por %p161, %p162
    %p164 = scmp.ne.s32.totalorder %s155, %s156
    %p165 = scmp.eq.s32.totalorder %s19, 0
    %p166 = por %p164, %p165
    %p167 = scmp.ne.s32.totalorder %s155, %s156
    %p168 = scmp.eq.s32.totalorder %s20, 1
    %p169 = por %p167, %p168
    %p171 = scmp.ne.s32.totalorder %s156, %s170
    %p172 = scmp.eq.s32.totalorder %s20, 0
    %p173 = por %p171, %p172
    %s175 = sadd.s32 %s174, 1
    %p178 = scmp.eq.s32.totalorder %s14, 1
    %p179 = scmp.ne.s32.totalorder %s174, %s176
    %p180 = scmp.eq.s32.totalorder %s14, 0
    %p181 = por %p179, %p180
    %p182 = scmp.ne.s32.totalorder %s174, %s176
    %p183 = scmp.eq.s32.totalorder %s19, 1
    %p184 = por %p182, %p183
    %p185 = scmp.ne.s32.totalorder %s176, %s177
    %p186 = scmp.eq.s32.totalorder %s19, 0
    %p187 = por %p185, %p186
    %p188 = scmp.ne.s32.totalorder %s176, %s177
    %p189 = scmp.eq.s32.totalorder %s20, 1
    %p190 = por %p188, %p189
    %p192 = scmp.ne.s32.totalorder %s177, %s191
    %p193 = scmp.eq.s32.totalorder %s20, 0
    %p194 = por %p192, %p193
    %s195 = ssub.s32 %s14, %s21
    %p196 = scmp.eq.s32.totalorder %s195, 0
    %s198 = sadd.s32 %s197, 1
    %s199 = scalar_select %p196, %s197, %s198
    %p202 = pneg %p196
    %p203 = scmp.eq.s32.totalorder %s14, 1
    %p204 = por %p202, %p203
    %p205 = scmp.ne.s32.totalorder %s197, %s200
    %p206 = scmp.eq.s32.totalorder %s14, 0
    %p207 = por %p205, %p206
    %p208 = scmp.ne.s32.totalorder %s197, %s200
    %p209 = scmp.eq.s32.totalorder %s19, 1
    %p210 = por %p208, %p209
    %p211 = scmp.ne.s32.totalorder %s200, %s201
    %p212 = scmp.eq.s32.totalorder %s19, 0
    %p213 = por %p211, %p212
    %p214 = scmp.ne.s32.totalorder %s200, %s201
    %p215 = scmp.eq.s32.totalorder %s20, 1
    %p216 = por %p214, %p215
    %p218 = scmp.ne.s32.totalorder %s201, %s217
    %p219 = scmp.eq.s32.totalorder %s20, 0
    %p220 = por %p218, %p219
    %p221 = scmp.le.s32.totalorder 1, %s14
    %p222 = scmp.lt.s32.totalorder %s14, 3
    %p223 = pnand %p221, %p222
    %p224 = pneg %p223
    // Predicated region
    $region9: #{tpu_custom_call.1} parent=5 // pred_check
      _
    $region10: #{tpu_custom_call.1} parent=5 // pred_check_branch
      %226 = sbr.rel (%p223) target = $region12
    $region11: #{tpu_custom_call.1} parent=5 // pred_region
      %s227 = ssub.s32 %s14, 1
      // Predicated region
      $region13: #{tpu_custom_call.1} parent=11 // pred_check
        %p228 = pneg %p61
      $region14: #{tpu_custom_call.1} parent=11 // pred_check_branch
        %230 = sbr.rel (%p228) target = $region16
      $region15: #{tpu_custom_call.1} parent=11 // pred_region
        _
      $region16: #{tpu_custom_call.1} parent=11 // pred_fallthru
        _
      // Predicated region
      $region17: #{tpu_custom_call.1} parent=11 // pred_check
        %p231 = pneg %p82
      $region18: #{tpu_custom_call.1} parent=11 // pred_check_branch
        %233 = sbr.rel (%p231) target = $region20
      $region19: #{tpu_custom_call.1} parent=11 // pred_region
        _
      $region20: #{tpu_custom_call.1} parent=11 // pred_fallthru
        _
      // Predicated region
      $region21: #{tpu_custom_call.1} parent=11 // pred_check
        %p234 = pneg %p103
      $region22: #{tpu_custom_call.1} parent=11 // pred_check_branch
        %236 = sbr.rel (%p234) target = $region24
      $region23: #{tpu_custom_call.1} parent=11 // pred_region
        _
      $region24: #{tpu_custom_call.1} parent=11 // pred_fallthru
        _
      // Predicated region
      $region25: #{tpu_custom_call.1} parent=11 // pred_check
        %p237 = pneg %p124
      $region26: #{tpu_custom_call.1} parent=11 // pred_check_branch
        %239 = sbr.rel (%p237) target = $region28
      $region27: #{tpu_custom_call.1} parent=11 // pred_region
        _
      $region28: #{tpu_custom_call.1} parent=11 // pred_fallthru
        _
      // Predicated region
      $region29: #{tpu_custom_call.1} parent=11 // pred_check
        %p240 = pneg %p145
      $region30: #{tpu_custom_call.1} parent=11 // pred_check_branch
        %242 = sbr.rel (%p240) target = $region32
      $region31: #{tpu_custom_call.1} parent=11 // pred_region
        _
      $region32: #{tpu_custom_call.1} parent=11 // pred_fallthru
        _
      // Predicated region
      $region33: #{tpu_custom_call.1} parent=11 // pred_check
        %p243 = pneg %p166
      $region34: #{tpu_custom_call.1} parent=11 // pred_check_branch
        %245 = sbr.rel (%p243) target = $region36
      $region35: #{tpu_custom_call.1} parent=11 // pred_region
        _
      $region36: #{tpu_custom_call.1} parent=11 // pred_fallthru
        _
      // Predicated region
      $region37: #{tpu_custom_call.1} parent=11 // pred_check
        %p246 = pneg %p187
      $region38: #{tpu_custom_call.1} parent=11 // pred_check_branch
        %248 = sbr.rel (%p246) target = $region40
      $region39: #{tpu_custom_call.1} parent=11 // pred_region
        _
      $region40: #{tpu_custom_call.1} parent=11 // pred_fallthru
        _
    $region12: #{tpu_custom_call.1} parent=5 // pred_fallthru
      _
    %p249 = scmp.lt.s32.totalorder %s14, 2
    // Predicated region
    $region41: #{tpu_custom_call.1} parent=5 // pred_check
      %p250 = pneg %p249
    $region42: #{tpu_custom_call.1} parent=5 // pred_check_branch
      %252 = sbr.rel (%p250) target = $region44
    $region43: #{tpu_custom_call.1} parent=5 // pred_region
      // Predicated region
      $region45: #{tpu_custom_call.1} parent=43 // pred_check
        %p253 = pneg %p34
      $region46: #{tpu_custom_call.1} parent=43 // pred_check_branch
        %255 = sbr.rel (%p253) target = $region48
      $region47: #{tpu_custom_call.1} parent=43 // pred_region
        %p256 = scmp.lt.s32.totalorder %s14, 1
        %s257 = scalar_select %p256, %s14, 1
        %s258 = smul.addr %s257, 8
        %s259 = smul.addr %s258, 8
        %s260 = scalar_lea.vmem %s0, %s259
      $region48: #{tpu_custom_call.1} parent=43 // pred_fallthru
        _
    $region44: #{tpu_custom_call.1} parent=5 // pred_fallthru
      _
    %p261 = scmp.le.s32.totalorder 1, %s14
    %p262 = scmp.lt.s32.totalorder %s14, 3
    %p263 = pnand %p261, %p262
    %p264 = pneg %p263
    // Predicated region
    $region49: #{tpu_custom_call.1} parent=5 // pred_check
      _
    $region50: #{tpu_custom_call.1} parent=5 // pred_check_branch
      %266 = sbr.rel (%p263) target = $region52
    $region51: #{tpu_custom_call.1} parent=5 // pred_region
      %s267 = ssub.s32 %s14, 1
      %p268 = scmp.lt.s32.totalorder %s19, 1
      %s269 = scalar_select %p268, %s19, 1
      %s270 = smul.addr %s269, 8
      %s271 = smul.addr %s270, 8
      %s272 = scalar_lea.vmem %s0, %s271
      %p273 = pneg %p40
      %p274 = pneg %p37
      %p275 = pneg %p61
      %p276 = pneg %p58
      %p277 = pneg %p82
      %p278 = pneg %p79
      %p279 = pneg %p103
      %p280 = pneg %p100
      %p281 = pneg %p124
      %p282 = pneg %p121
      %p283 = pneg %p145
      %p284 = pneg %p142
      %p285 = pneg %p166
      %p286 = pneg %p163
      %p287 = pneg %p187
      %p288 = pneg %p184
      %p289 = pneg %p213
      %p290 = pneg %p210
      %p291 = scmp.lt.s32.totalorder %s19, 1
      %s292 = scalar_select %p291, %s19, 1
      %s293 = smul.addr %s292, 8
      %s294 = smul.addr %s293, 8
      %s295 = scalar_lea.vmem %s8, %s294
      %p296 = scmp.lt.s32.totalorder %s19, 1
      %s297 = scalar_select %p296, %s19, 1
      %s298 = smul.addr %s297, 8
      %s299 = smul.addr %s298, 8
      %s300 = scalar_lea.vmem %s0, %s299
      %p301 = scmp.lt.s32.totalorder %s19, 1
      %s302 = scalar_select %p301, %s19, 1
      %s303 = smul.addr %s302, 8
      %s304 = smul.addr %s303, 8
      %s305 = scalar_lea.vmem %s8, %s304
      %v306 = vld [vmem:[%s300] sm:$0xff]
      %v307 = vld [vmem:[%s300 + $0x8] sm:$0xff]
      %v308 = vld [vmem:[%s300 + $0x10] sm:$0xff]
      %v309 = vld [vmem:[%s300 + $0x18] sm:$0xff]
      %v310 = vld [vmem:[%s300 + $0x20] sm:$0xff]
      %v311 = vld [vmem:[%s300 + $0x28] sm:$0xff]
      %v312 = vld [vmem:[%s300 + $0x30] sm:$0xff]
      %v313 = vld [vmem:[%s300 + $0x38] sm:$0xff]
      %v314 = vld [vmem:[%s2] sm:$0xff]
      %v315 = vld [vmem:[%s2 + $0x8] sm:$0xff]
      %v316 = vld [vmem:[%s2 + $0x10] sm:$0xff]
      %v317 = vld [vmem:[%s2 + $0x18] sm:$0x7]
      %v318 = vld [vmem:[%s3] sm:$0xf]
      %v319 = vld [vmem:[%s4] sm:$0xf]
      %v320 = vld [vmem:[%s7] sm:$0xff]
      %v321 = vld [vmem:[%s7 + $0x8] sm:$0xff]
      %v322 = vld [vmem:[%s7 + $0x10] sm:$0xff]
      %v323 = vld [vmem:[%s7 + $0x18] sm:$0xff]
      %v324 = vld [vmem:[%s7 + $0x20] sm:$0xff]
      %v325 = vld [vmem:[%s7 + $0x28] sm:$0xff]
      %v326 = vld [vmem:[%s7 + $0x30] sm:$0xff]
      %v327 = vld [vmem:[%s7 + $0x38] sm:$0xff]
      %vm328 = vcmask 64512
      %329 = vst.msk [vmem:[#allocation2] sm:$0xff] %vm328, 0.0
      %330 = vst.msk [vmem:[#allocation2 + $0x8] sm:$0xff] %vm328, 0.0
      %331 = vst.msk [vmem:[#allocation2 + $0x50] sm:$0xff] %vm328, 0.0
      %332 = vst.msk [vmem:[#allocation2 + $0x58] sm:$0xff] %vm328, 0.0
      %v333 = vld [vmem:[%s1] sm:$0xff]
      %v335 = vsel %vm328, %v306, 0
      %v338 = vsel %vm328, %v307, 0
      %v341 = vsel %vm328, %v308, 0
      %v344 = vsel %vm328, %v309, 0
      %v347 = vsel %vm328, %v310, 0
      %v350 = vsel %vm328, %v311, 0
      %v353 = vsel %vm328, %v312, 0
      %v356 = vsel %vm328, %v313, 0
      %358 = vmatprep.subr.mxu0 0.0
      %359 = vmatpush1.msra.mxu0 %v333
      %360 = vmatprep.subr.mxu0 0.0
      %361 = vmatpush1.msra.mxu0 0.0
      %362 = vmatprep.subr.mxu0 0.0
      %363 = vmatpush1.msra.mxu0 0.0
      %364 = vmatprep.subr.mxu0 0.0
      %365 = vmatpush1.msra.mxu0 0.0
      %366 = vmatprep.subr.mxu0 0.0
      %367 = vmatpush1.msra.mxu0 0.0
      %368 = vmatprep.subr.mxu0 0.0
      %369 = vmatpush1.msra.mxu0 0.0
      %370 = vmatprep.subr.mxu0 0.0
      %371 = vmatpush1.msra.mxu0 0.0
      %372 = vmatprep.subr.mxu0 0.0
      %373 = vmatpush1.msra.mxu0 0.0
      %374 = vmatprep.subr.mxu0 0.0
      %375 = vmatpush1.msra.mxu0 0.0
      %376 = vmatprep.subr.mxu0 0.0
      %377 = vmatpush1.msra.mxu0 0.0
      %378 = vmatprep.subr.mxu0 0.0
      %379 = vmatpush1.msra.mxu0 0.0
      %380 = vmatprep.subr.mxu0 0.0
      %381 = vmatpush1.msra.mxu0 0.0
      %382 = vmatprep.subr.mxu0 0.0
      %383 = vmatpush1.msra.mxu0 0.0
      %384 = vmatprep.subr.mxu0 0.0
      %385 = vmatpush1.msra.mxu0 0.0
      %386 = vmatprep.subr.mxu0 0.0
      %387 = vmatpush1.msra.mxu0 0.0
      %388 = vmatprep.subr.mxu0 0.0
      %389 = vmatpush1.msra.mxu0 0.0
      %390 = vmatprep.subr.mxu0 0.0
      %391 = vmatpush1.msra.mxu0 0.0
      %392 = vmatprep.subr.mxu0 0.0
      %393 = vmatpush1.msra.mxu0 0.0
      %394 = vmatprep.subr.mxu0 0.0
      %395 = vmatpush1.msra.mxu0 0.0
      %396 = vmatprep.subr.mxu0 0.0
      %397 = vmatpush1.msra.mxu0 0.0
      %398 = vmatprep.subr.mxu0 0.0
      %399 = vmatpush1.msra.mxu0 0.0
      %400 = vmatprep.subr.mxu0 0.0
      %401 = vmatpush1.msra.mxu0 0.0
      %402 = vmatprep.subr.mxu0 0.0
      %403 = vmatpush1.msra.mxu0 0.0
      %404 = vmatprep.subr.mxu0 0.0
      %405 = vmatpush1.msra.mxu0 0.0
      %406 = vmatprep.subr.mxu0 0.0
      %407 = vmatpush1.msra.mxu0 0.0
      %408 = vmatprep.subr.mxu0 0.0
      %409 = vmatpush1.msra.mxu0 0.0
      %410 = vmatprep.subr.mxu0 0.0
      %411 = vmatpush1.msra.mxu0 0.0
      %412 = vmatprep.subr.mxu0 0.0
      %413 = vmatpush1.msra.mxu0 0.0
      %414 = vmatprep.subr.mxu0 0.0
      %415 = vmatpush1.msra.mxu0 0.0
      %416 = vmatprep.subr.mxu0 0.0
      %417 = vmatpush1.msra.mxu0 0.0
      %418 = vmatprep.subr.mxu0 0.0
      %419 = vmatpush1.msra.mxu0 0.0
      %420 = vmatprep.subr.mxu0 0.0
      %421 = vmatpush1.msra.mxu0 0.0
      %422 = vmatprep.mubr.f32.mxu0 0.0
      %423 = vmatmul.mubr.f32.gmra.mrb[0].mxu0 %v335
      %v424 = vpop.f32.mrb[0].mxu0
      %v425 = vadd.f32 0.0, %v424
      %v426 = vpop.f32.mrb[0].mxu0
      %427 = vmatprep.mubr.f32.mxu0 0.0
      %428 = vmatmul.mubr.f32.gmra.mrb[0].mxu0 %v338
      %v429 = vpop.f32.mrb[0].mxu0
      %v430 = vadd.f32 0.0, %v429
      %v431 = vpop.f32.mrb[0].mxu0
      %432 = vmatprep.mubr.f32.mxu0 0.0
      %433 = vmatmul.mubr.f32.gmra.mrb[0].mxu0 %v341
      %v434 = vpop.f32.mrb[0].mxu0
      %v435 = vadd.f32 0.0, %v434
      %v436 = vpop.f32.mrb[0].mxu0
      %437 = vmatprep.mubr.f32.mxu0 0.0
      %438 = vmatmul.mubr.f32.gmra.mrb[0].mxu0 %v344
      %v439 = vpop.f32.mrb[0].mxu0
      %v440 = vadd.f32 0.0, %v439
      %v441 = vpop.f32.mrb[0].mxu0
      %442 = vmatprep.mubr.f32.mxu0 0.0
      %443 = vmatmul.mubr.f32.gmra.mrb[0].mxu0 %v347
      %v444 = vpop.f32.mrb[0].mxu0
      %v445 = vadd.f32 0.0, %v444
      %v446 = vpop.f32.mrb[0].mxu0
      %447 = vmatprep.mubr.f32.mxu0 0.0
      %448 = vmatmul.mubr.f32.gmra.mrb[0].mxu0 %v350
      %v449 = vpop.f32.mrb[0].mxu0
      %v450 = vadd.f32 0.0, %v449
      %v451 = vpop.f32.mrb[0].mxu0
      %452 = vmatprep.mubr.f32.mxu0 0.0
      %453 = vmatmul.mubr.f32.gmra.mrb[0].mxu0 %v353
      %v454 = vpop.f32.mrb[0].mxu0
      %v455 = vadd.f32 0.0, %v454
      %v456 = vpop.f32.mrb[0].mxu0
      %457 = vmatprep.mubr.f32.mxu0 0.0
      %458 = vmatmul.mubr.f32.gmra.mrb[0].mxu0 %v356
      %v459 = vpop.f32.mrb[0].mxu0
      %v460 = vadd.f32 0.0, %v459
      %v461 = vpop.f32.mrb[0].mxu0
      %462 = vdwg.mxu0
      %v463 = vsel %vm328, %v425, 0.0
      %v464 = vsel %vm328, %v430, 0.0
      %v465 = vadd.f32 %v463, %v464
      %v466 = vsel %vm328, %v435, 0.0
      %v467 = vadd.f32 %v465, %v466
      %v468 = vsel %vm328, %v440, 0.0
      %v469 = vadd.f32 %v467, %v468
      %v470 = vsel %vm328, %v445, 0.0
      %v471 = vadd.f32 %v469, %v470
      %v472 = vsel %vm328, %v450, 0.0
      %v473 = vadd.f32 %v471, %v472
      %v474 = vsel %vm328, %v455, 0.0
      %v475 = vadd.f32 %v473, %v474
      %v476 = vsel %vm328, %v460, 0.0
      %v477 = vadd.f32 %v475, %v476
      %478 = vadd.xlane.f32.xlu0 %v477
      %v479 = vpop.xlane.xlu0 %478
      %v480 = vrot.slane %v479, 4
      %v481 = vadd.f32 %v479, %v480
      %v482 = vrot.slane %v481, 2
      %v483 = vadd.f32 %v481, %v482
      %v484 = vrot.slane %v483, 1
      %v485 = vadd.f32 %v483, %v484
      %s486 = vtos %v485
      %v487 = vmul.f32 %v425, %v425
      %v488 = vmul.f32 %v430, %v430
      %v489 = vmul.f32 %v435, %v435
      %v490 = vmul.f32 %v440, %v440
      %v491 = vmul.f32 %v445, %v445
      %v492 = vmul.f32 %v450, %v450
      %v493 = vmul.f32 %v455, %v455
      %v494 = vmul.f32 %v460, %v460
      %v495 = vsel %vm328, %v487, 0.0
      %v496 = vsel %vm328, %v488, 0.0
      %v497 = vadd.f32 %v495, %v496
      %v498 = vsel %vm328, %v489, 0.0
      %v499 = vadd.f32 %v497, %v498
      %v500 = vsel %vm328, %v490, 0.0
      %v501 = vadd.f32 %v499, %v500
      %v502 = vsel %vm328, %v491, 0.0
      %v503 = vadd.f32 %v501, %v502
      %v504 = vsel %vm328, %v492, 0.0
      %v505 = vadd.f32 %v503, %v504
      %v506 = vsel %vm328, %v493, 0.0
      %v507 = vadd.f32 %v505, %v506
      %v508 = vsel %vm328, %v494, 0.0
      %v509 = vadd.f32 %v507, %v508
      %510 = vadd.xlane.f32.xlu0 %v509
      %v511 = vpop.xlane.xlu0 %510
      %v512 = vrot.slane %v511, 4
      %v513 = vadd.f32 %v511, %v512
      %v514 = vrot.slane %v513, 2
      %v515 = vadd.f32 %v513, %v514
      %v516 = vrot.slane %v515, 1
      %v517 = vadd.f32 %v515, %v516
      %s518 = vtos %v517
      %s519 = smul.f32 %s486, 0.001953125
      %s520 = smul.f32 %s518, 0.001953125
      %s521 = smul.f32 %s519, %s519
      %s522 = ssub.f32 %s520, %s521
      %s523 = sadd.f32 %s522, 1e-05
      %v524 = vstv %s523
      %v525 = vrsqrt.pop %v524
      %s526 = vtos %v525
      %v527 = vstv %s526
      %v528 = vmul.f32 %v318, %v527
      %v529 = vstv %s519
      %v530 = vmul.f32 %v529, %v528
      %v531 = vsub.f32 %v319, %v530
      %v532 = vlaneseq
      %v533 = vshrl.u32 %v532, 7
      %v534 = vsub.s32 0, %v533
      %v535 = vrot.slane %v528, %v534
      %v536 = vmul.f32 %v425, %v535
      %v537 = vmul.f32 %v430, %v535
      %v538 = vmul.f32 %v435, %v535
      %v539 = vmul.f32 %v440, %v535
      %v540 = vmul.f32 %v445, %v535
      %v541 = vmul.f32 %v450, %v535
      %v542 = vmul.f32 %v455, %v535
      %v543 = vmul.f32 %v460, %v535
      %v544 = vlaneseq
      %v545 = vshrl.u32 %v544, 7
      %v546 = vsub.s32 0, %v545
      %v547 = vrot.slane %v531, %v546
      %v548 = vadd.f32 %v536, %v547
      %v549 = vadd.f32 %v537, %v547
      %v550 = vadd.f32 %v538, %v547
      %v551 = vadd.f32 %v539, %v547
      %v552 = vadd.f32 %v540, %v547
      %v553 = vadd.f32 %v541, %v547
      %v554 = vadd.f32 %v542, %v547
      %v555 = vadd.f32 %v543, %v547
      %556 = vst.msk [vmem:[#allocation2 + $0x10] sm:$0xff] %vm328, %v548
      %557 = vst.msk [vmem:[#allocation2 + $0x18] sm:$0xff] %vm328, %v549
      %558 = vst.msk [vmem:[#allocation2 + $0x20] sm:$0xff] %vm328, %v550
      %559 = vst.msk [vmem:[#allocation2 + $0x28] sm:$0xff] %vm328, %v551
      %560 = vst.msk [vmem:[#allocation2 + $0x30] sm:$0xff] %vm328, %v552
      %561 = vst.msk [vmem:[#allocation2 + $0x38] sm:$0xff] %vm328, %v553
      %562 = vst.msk [vmem:[#allocation2 + $0x40] sm:$0xff] %vm328, %v554
      %563 = vst.msk [vmem:[#allocation2 + $0x48] sm:$0xff] %vm328, %v555
      %v564 = vld [vmem:[#allocation2 + $0x7] sm:$0xff]
      %v565 = vld [vmem:[#allocation2 + $0xf] sm:$0xff]
      %v566 = vld [vmem:[#allocation2 + $0x17] sm:$0xff]
      %v567 = vld [vmem:[#allocation2 + $0x1f] sm:$0xff]
      %v568 = vld [vmem:[#allocation2 + $0x27] sm:$0xff]
      %v569 = vld [vmem:[#allocation2 + $0x2f] sm:$0xff]
      %v570 = vld [vmem:[#allocation2 + $0x37] sm:$0xff]
      %v571 = vld [vmem:[#allocation2 + $0x3f] sm:$0xff]
      %v572 = vlaneseq
      %v573 = vshrl.u32 %v572, 7
      %v574 = vsub.s32 0, %v573
      %v575 = vrot.slane %v314, %v574
      %v576 = vmul.f32 %v575, %v564
      %v577 = vmul.f32 %v575, %v565
      %v578 = vmul.f32 %v575, %v566
      %v579 = vmul.f32 %v575, %v567
      %v580 = vmul.f32 %v575, %v568
      %v581 = vmul.f32 %v575, %v569
      %v582 = vmul.f32 %v575, %v570
      %v583 = vmul.f32 %v575, %v571
      %585 = vset.pattern.permute.xlu0 0
      %586 = vperm.xlu0 %585, %v320
      %v587 = vpop.permute.xlu0 %586
      %590 = vset.pattern.permute.xlu0 0
      %591 = vperm.xlu0 %590, %v321
      %v592 = vpop.permute.xlu0 %591
      %595 = vset.pattern.permute.xlu0 0
      %596 = vperm.xlu0 %595, %v322
      %v597 = vpop.permute.xlu0 %596
      %600 = vset.pattern.permute.xlu0 0
      %601 = vperm.xlu0 %600, %v323
      %v602 = vpop.permute.xlu0 %601
      %605 = vset.pattern.permute.xlu0 0
      %606 = vperm.xlu0 %605, %v324
      %v607 = vpop.permute.xlu0 %606
      %610 = vset.pattern.permute.xlu0 0
      %611 = vperm.xlu0 %610, %v325
      %v612 = vpop.permute.xlu0 %611
      %615 = vset.pattern.permute.xlu0 0
      %616 = vperm.xlu0 %615, %v326
      %v617 = vpop.permute.xlu0 %616
      %620 = vset.pattern.permute.xlu0 0
      %621 = vperm.xlu0 %620, %v327
      %v622 = vpop.permute.xlu0 %621
      %v624 = vmul.f32 %v576, %v587
      %v625 = vmul.f32 %v577, %v592
      %v626 = vmul.f32 %v578, %v597
      %v627 = vmul.f32 %v579, %v602
      %v628 = vmul.f32 %v580, %v607
      %v629 = vmul.f32 %v581, %v612
      %v630 = vmul.f32 %v582, %v617
      %v631 = vmul.f32 %v583, %v622
      %v632 = vld [vmem:[#allocation2 + $0x8] sm:$0xff]
      %v633 = vld [vmem:[#allocation2 + $0x10] sm:$0xff]
      %v634 = vld [vmem:[#allocation2 + $0x18] sm:$0xff]
      %v635 = vld [vmem:[#allocation2 + $0x20] sm:$0xff]
      %v636 = vld [vmem:[#allocation2 + $0x28] sm:$0xff]
      %v637 = vld [vmem:[#allocation2 + $0x30] sm:$0xff]
      %v638 = vld [vmem:[#allocation2 + $0x38] sm:$0xff]
      %v639 = vld [vmem:[#allocation2 + $0x40] sm:$0xff]
      %v640 = vlaneseq
      %v641 = vshrl.u32 %v640, 7
      %v642 = vsub.s32 1, %v641
      %v643 = vrot.slane %v314, %v642
      %v644 = vmul.f32 %v643, %v632
      %v645 = vmul.f32 %v643, %v633
      %v646 = vmul.f32 %v643, %v634
      %v647 = vmul.f32 %v643, %v635
      %v648 = vmul.f32 %v643, %v636
      %v649 = vmul.f32 %v643, %v637
      %v650 = vmul.f32 %v643, %v638
      %v651 = vmul.f32 %v643, %v639
      %v652 = vadd.f32 %v624, %v644
      %v653 = vadd.f32 %v625, %v645
      %v654 = vadd.f32 %v626, %v646
      %v655 = vadd.f32 %v627, %v647
      %v656 = vadd.f32 %v628, %v648
      %v657 = vadd.f32 %v629, %v649
      %v658 = vadd.f32 %v630, %v650
      %v659 = vadd.f32 %v631, %v651
      %v660 = vld [vmem:[#allocation2 + $0x9] sm:$0xff]
      %v661 = vld [vmem:[#allocation2 + $0x11] sm:$0xff]
      %v662 = vld [vmem:[#allocation2 + $0x19] sm:$0xff]
      %v663 = vld [vmem:[#allocation2 + $0x21] sm:$0xff]
      %v664 = vld [vmem:[#allocation2 + $0x29] sm:$0xff]
      %v665 = vld [vmem:[#allocation2 + $0x31] sm:$0xff]
      %v666 = vld [vmem:[#allocation2 + $0x39] sm:$0xff]
      %v667 = vld [vmem:[#allocation2 + $0x41] sm:$0xff]
      %v668 = vlaneseq
      %v669 = vshrl.u32 %v668, 7
      %v670 = vsub.s32 2, %v669
      %v671 = vrot.slane %v314, %v670
      %v672 = vmul.f32 %v671, %v660
      %v673 = vmul.f32 %v671, %v661
      %v674 = vmul.f32 %v671, %v662
      %v675 = vmul.f32 %v671, %v663
      %v676 = vmul.f32 %v671, %v664
      %v677 = vmul.f32 %v671, %v665
      %v678 = vmul.f32 %v671, %v666
      %v679 = vmul.f32 %v671, %v667
      %680 = vset.pattern.permute.xlu0 1
      %681 = vperm.xlu0 %680, %v320
      %v682 = vpop.permute.xlu0 %681
      %684 = vset.pattern.permute.xlu0 1
      %685 = vperm.xlu0 %684, %v321
      %v686 = vpop.permute.xlu0 %685
      %688 = vset.pattern.permute.xlu0 1
      %689 = vperm.xlu0 %688, %v322
      %v690 = vpop.permute.xlu0 %689
      %692 = vset.pattern.permute.xlu0 1
      %693 = vperm.xlu0 %692, %v323
      %v694 = vpop.permute.xlu0 %693
      %696 = vset.pattern.permute.xlu0 1
      %697 = vperm.xlu0 %696, %v324
      %v698 = vpop.permute.xlu0 %697
      %700 = vset.pattern.permute.xlu0 1
      %701 = vperm.xlu0 %700, %v325
      %v702 = vpop.permute.xlu0 %701
      %704 = vset.pattern.permute.xlu0 1
      %705 = vperm.xlu0 %704, %v326
      %v706 = vpop.permute.xlu0 %705
      %708 = vset.pattern.permute.xlu0 1
      %709 = vperm.xlu0 %708, %v327
      %v710 = vpop.permute.xlu0 %709
      %v712 = vmul.f32 %v672, %v682
      %v713 = vmul.f32 %v673, %v686
      %v714 = vmul.f32 %v674, %v690
      %v715 = vmul.f32 %v675, %v694
      %v716 = vmul.f32 %v676, %v698
      %v717 = vmul.f32 %v677, %v702
      %v718 = vmul.f32 %v678, %v706
      %v719 = vmul.f32 %v679, %v710
      %v720 = vadd.f32 %v652, %v712
      %v721 = vadd.f32 %v653, %v713
      %v722 = vadd.f32 %v654, %v714
      %v723 = vadd.f32 %v655, %v715
      %v724 = vadd.f32 %v656, %v716
      %v725 = vadd.f32 %v657, %v717
      %v726 = vadd.f32 %v658, %v718
      %v727 = vadd.f32 %v659, %v719
      %v728 = vld [vmem:[#allocation2 + $0xf] sm:$0xff]
      %v729 = vld [vmem:[#allocation2 + $0x17] sm:$0xff]
      %v730 = vld [vmem:[#allocation2 + $0x1f] sm:$0xff]
      %v731 = vld [vmem:[#allocation2 + $0x27] sm:$0xff]
      %v732 = vld [vmem:[#allocation2 + $0x2f] sm:$0xff]
      %v733 = vld [vmem:[#allocation2 + $0x37] sm:$0xff]
      %v734 = vld [vmem:[#allocation2 + $0x3f] sm:$0xff]
      %v735 = vld [vmem:[#allocation2 + $0x47] sm:$0xff]
      %v736 = vlaneseq
      %v737 = vshrl.u32 %v736, 7
      %v738 = vsub.s32 3, %v737
      %v739 = vrot.slane %v314, %v738
      %v740 = vmul.f32 %v739, %v728
      %v741 = vmul.f32 %v739, %v729
      %v742 = vmul.f32 %v739, %v730
      %v743 = vmul.f32 %v739, %v731
      %v744 = vmul.f32 %v739, %v732
      %v745 = vmul.f32 %v739, %v733
      %v746 = vmul.f32 %v739, %v734
      %v747 = vmul.f32 %v739, %v735
      %v748 = vmul.f32 %v740, %v587
      %v749 = vmul.f32 %v741, %v592
      %v750 = vmul.f32 %v742, %v597
      %v751 = vmul.f32 %v743, %v602
      %v752 = vmul.f32 %v744, %v607
      %v753 = vmul.f32 %v745, %v612
      %v754 = vmul.f32 %v746, %v617
      %v755 = vmul.f32 %v747, %v622
      %v756 = vadd.f32 %v720, %v748
      %v757 = vadd.f32 %v721, %v749
      %v758 = vadd.f32 %v722, %v750
      %v759 = vadd.f32 %v723, %v751
      %v760 = vadd.f32 %v724, %v752
      %v761 = vadd.f32 %v725, %v753
      %v762 = vadd.f32 %v726, %v754
      %v763 = vadd.f32 %v727, %v755
      %v764 = vld [vmem:[#allocation2 + $0x10] sm:$0xff]
      %v765 = vld [vmem:[#allocation2 + $0x18] sm:$0xff]
      %v766 = vld [vmem:[#allocation2 + $0x20] sm:$0xff]
      %v767 = vld [vmem:[#allocation2 + $0x28] sm:$0xff]
      %v768 = vld [vmem:[#allocation2 + $0x30] sm:$0xff]
      %v769 = vld [vmem:[#allocation2 + $0x38] sm:$0xff]
      %v770 = vld [vmem:[#allocation2 + $0x40] sm:$0xff]
      %v771 = vld [vmem:[#allocation2 + $0x48] sm:$0xff]
      %v772 = vlaneseq
      %v773 = vshrl.u32 %v772, 7
      %v774 = vsub.s32 4, %v773
      %v775 = vrot.slane %v314, %v774
      %v776 = vmul.f32 %v775, %v764
      %v777 = vmul.f32 %v775, %v765
      %v778 = vmul.f32 %v775, %v766
      %v779 = vmul.f32 %v775, %v767
      %v780 = vmul.f32 %v775, %v768
      %v781 = vmul.f32 %v775, %v769
      %v782 = vmul.f32 %v775, %v770
      %v783 = vmul.f32 %v775, %v771
      %v784 = vadd.f32 %v756, %v776
      %v785 = vadd.f32 %v757, %v777
      %v786 = vadd.f32 %v758, %v778
      %v787 = vadd.f32 %v759, %v779
      %v788 = vadd.f32 %v760, %v780
      %v789 = vadd.f32 %v761, %v781
      %v790 = vadd.f32 %v762, %v782
      %v791 = vadd.f32 %v763, %v783
      %v792 = vld [vmem:[#allocation2 + $0x11] sm:$0xff]
      %v793 = vld [vmem:[#allocation2 + $0x19] sm:$0xff]
      %v794 = vld [vmem:[#allocation2 + $0x21] sm:$0xff]
      %v795 = vld [vmem:[#allocation2 + $0x29] sm:$0xff]
      %v796 = vld [vmem:[#allocation2 + $0x31] sm:$0xff]
      %v797 = vld [vmem:[#allocation2 + $0x39] sm:$0xff]
      %v798 = vld [vmem:[#allocation2 + $0x41] sm:$0xff]
      %v799 = vld [vmem:[#allocation2 + $0x49] sm:$0xff]
      %v800 = vlaneseq
      %v801 = vshrl.u32 %v800, 7
      %v802 = vsub.s32 5, %v801
      %v803 = vrot.slane %v314, %v802
      %v804 = vmul.f32 %v803, %v792
      %v805 = vmul.f32 %v803, %v793
      %v806 = vmul.f32 %v803, %v794
      %v807 = vmul.f32 %v803, %v795
      %v808 = vmul.f32 %v803, %v796
      %v809 = vmul.f32 %v803, %v797
      %v810 = vmul.f32 %v803, %v798
      %v811 = vmul.f32 %v803, %v799
      %v812 = vmul.f32 %v804, %v682
      %v813 = vmul.f32 %v805, %v686
      %v814 = vmul.f32 %v806, %v690
      %v815 = vmul.f32 %v807, %v694
      %v816 = vmul.f32 %v808, %v698
      %v817 = vmul.f32 %v809, %v702
      %v818 = vmul.f32 %v810, %v706
      %v819 = vmul.f32 %v811, %v710
      %v820 = vadd.f32 %v784, %v812
      %v821 = vadd.f32 %v785, %v813
      %v822 = vadd.f32 %v786, %v814
      %v823 = vadd.f32 %v787, %v815
      %v824 = vadd.f32 %v788, %v816
      %v825 = vadd.f32 %v789, %v817
      %v826 = vadd.f32 %v790, %v818
      %v827 = vadd.f32 %v791, %v819
      %v828 = vld [vmem:[#allocation2 + $0x4f] sm:$0xff]
      %v829 = vlaneseq
      %v830 = vshrl.u32 %v829, 7
      %v831 = vsub.s32 6, %v830
      %v832 = vrot.slane %v314, %v831
      %v833 = vmul.f32 %v832, %v729
      %v834 = vmul.f32 %v832, %v730
      %v835 = vmul.f32 %v832, %v731
      %v836 = vmul.f32 %v832, %v732
      %v837 = vmul.f32 %v832, %v733
      %v838 = vmul.f32 %v832, %v734
      %v839 = vmul.f32 %v832, %v735
      %v840 = vmul.f32 %v832, %v828
      %v841 = vmul.f32 %v833, %v587
      %v842 = vmul.f32 %v834, %v592
      %v843 = vmul.f32 %v835, %v597
      %v844 = vmul.f32 %v836, %v602
      %v845 = vmul.f32 %v837, %v607
      %v846 = vmul.f32 %v838, %v612
      %v847 = vmul.f32 %v839, %v617
      %v848 = vmul.f32 %v840, %v622
      %v849 = vadd.f32 %v820, %v841
      %v850 = vadd.f32 %v821, %v842
      %v851 = vadd.f32 %v822, %v843
      %v852 = vadd.f32 %v823, %v844
      %v853 = vadd.f32 %v824, %v845
      %v854 = vadd.f32 %v825, %v846
      %v855 = vadd.f32 %v826, %v847
      %v856 = vadd.f32 %v827, %v848
      %v857 = vld [vmem:[#allocation2 + $0x50] sm:$0xff]
      %v858 = vlaneseq
      %v859 = vshrl.u32 %v858, 7
      %v860 = vsub.s32 7, %v859
      %v861 = vrot.slane %v314, %v860
      %v862 = vmul.f32 %v861, %v765
      %v863 = vmul.f32 %v861, %v766
      %v864 = vmul.f32 %v861, %v767
      %v865 = vmul.f32 %v861, %v768
      %v866 = vmul.f32 %v861, %v769
      %v867 = vmul.f32 %v861, %v770
      %v868 = vmul.f32 %v861, %v771
      %v869 = vmul.f32 %v861, %v857
      %v870 = vadd.f32 %v849, %v862
      %v871 = vadd.f32 %v850, %v863
      %v872 = vadd.f32 %v851, %v864
      %v873 = vadd.f32 %v852, %v865
      %v874 = vadd.f32 %v853, %v866
      %v875 = vadd.f32 %v854, %v867
      %v876 = vadd.f32 %v855, %v868
      %v877 = vadd.f32 %v856, %v869
      %v878 = vld [vmem:[#allocation2 + $0x51] sm:$0xff]
      %v879 = vlaneseq
      %v880 = vshrl.u32 %v879, 7
      %v881 = vsub.s32 0, %v880
      %v882 = vrot.slane %v315, %v881
      %v883 = vmul.f32 %v882, %v793
      %v884 = vmul.f32 %v882, %v794
      %v885 = vmul.f32 %v882, %v795
      %v886 = vmul.f32 %v882, %v796
      %v887 = vmul.f32 %v882, %v797
      %v888 = vmul.f32 %v882, %v798
      %v889 = vmul.f32 %v882, %v799
      %v890 = vmul.f32 %v882, %v878
      %v891 = vmul.f32 %v883, %v682
      %v892 = vmul.f32 %v884, %v686
      %v893 = vmul.f32 %v885, %v690
      %v894 = vmul.f32 %v886, %v694
      %v895 = vmul.f32 %v887, %v698
      %v896 = vmul.f32 %v888, %v702
      %v897 = vmul.f32 %v889, %v706
      %v898 = vmul.f32 %v890, %v710
      %v899 = vadd.f32 %v870, %v891
      %v900 = vadd.f32 %v871, %v892
      %v901 = vadd.f32 %v872, %v893
      %v902 = vadd.f32 %v873, %v894
      %v903 = vadd.f32 %v874, %v895
      %v904 = vadd.f32 %v875, %v896
      %v905 = vadd.f32 %v876, %v897
      %v906 = vadd.f32 %v877, %v898
      %v907 = vsel %vm328, %v899, 0.0
      %v908 = vsel %vm328, %v900, 0.0
      %v909 = vadd.f32 %v907, %v908
      %v910 = vsel %vm328, %v901, 0.0
      %v911 = vadd.f32 %v909, %v910
      %v912 = vsel %vm328, %v902, 0.0
      %v913 = vadd.f32 %v911, %v912
      %v914 = vsel %vm328, %v903, 0.0
      %v915 = vadd.f32 %v913, %v914
      %v916 = vsel %vm328, %v904, 0.0
      %v917 = vadd.f32 %v915, %v916
      %v918 = vsel %vm328, %v905, 0.0
      %v919 = vadd.f32 %v917, %v918
      %v920 = vsel %vm328, %v906, 0.0
      %v921 = vadd.f32 %v919, %v920
      %922 = vadd.xlane.f32.xlu0 %v921
      %v923 = vpop.xlane.xlu0 %922
      %v924 = vrot.slane %v923, 4
      %v925 = vadd.f32 %v923, %v924
      %v926 = vrot.slane %v925, 2
      %v927 = vadd.f32 %v925, %v926
      %v928 = vrot.slane %v927, 1
      %v929 = vadd.f32 %v927, %v928
      %s930 = vtos %v929
      %v931 = vmul.f32 %v899, %v899
      %v932 = vmul.f32 %v900, %v900
      %v933 = vmul.f32 %v901, %v901
      %v934 = vmul.f32 %v902, %v902
      %v935 = vmul.f32 %v903, %v903
      %v936 = vmul.f32 %v904, %v904
      %v937 = vmul.f32 %v905, %v905
      %v938 = vmul.f32 %v906, %v906
      %v939 = vsel %vm328, %v931, 0.0
      %v940 = vsel %vm328, %v932, 0.0
      %v941 = vadd.f32 %v939, %v940
      %v942 = vsel %vm328, %v933, 0.0
      %v943 = vadd.f32 %v941, %v942
      %v944 = vsel %vm328, %v934, 0.0
      %v945 = vadd.f32 %v943, %v944
      %v946 = vsel %vm328, %v935, 0.0
      %v947 = vadd.f32 %v945, %v946
      %v948 = vsel %vm328, %v936, 0.0
      %v949 = vadd.f32 %v947, %v948
      %v950 = vsel %vm328, %v937, 0.0
      %v951 = vadd.f32 %v949, %v950
      %v952 = vsel %vm328, %v938, 0.0
      %v953 = vadd.f32 %v951, %v952
      %954 = vadd.xlane.f32.xlu0 %v953
      %v955 = vpop.xlane.xlu0 %954
      %v956 = vrot.slane %v955, 4
      %v957 = vadd.f32 %v955, %v956
      %v958 = vrot.slane %v957, 2
      %v959 = vadd.f32 %v957, %v958
      %v960 = vrot.slane %v959, 1
      %v961 = vadd.f32 %v959, %v960
      %s962 = vtos %v961
      %s963 = smul.f32 %s930, 0.001953125
      %s964 = smul.f32 %s962, 0.001953125
      %s965 = smul.f32 %s963, %s963
      %s966 = ssub.f32 %s964, %s965
      %s967 = sadd.f32 %s966, 1e-05
      %v968 = vstv %s967
      %v969 = vrsqrt.pop %v968
      %s970 = vtos %v969
      %v971 = vstv %s970
      %v972 = vmul.f32 %v318, %v971
      %v973 = vstv %s963
      %v974 = vmul.f32 %v973, %v972
      %v975 = vsub.f32 %v319, %v974
      %v976 = vlaneseq
      %v977 = vshrl.u32 %v976, 7
      %v978 = vsub.s32 1, %v977
      %v979 = vrot.slane %v972, %v978
      %v980 = vmul.f32 %v899, %v979
      %v981 = vmul.f32 %v900, %v979
      %v982 = vmul.f32 %v901, %v979
      %v983 = vmul.f32 %v902, %v979
      %v984 = vmul.f32 %v903, %v979
      %v985 = vmul.f32 %v904, %v979
      %v986 = vmul.f32 %v905, %v979
      %v987 = vmul.f32 %v906, %v979
      %v988 = vlaneseq
      %v989 = vshrl.u32 %v988, 7
      %v990 = vsub.s32 1, %v989
      %v991 = vrot.slane %v975, %v990
      %v992 = vadd.f32 %v980, %v991
      %v993 = vadd.f32 %v981, %v991
      %v994 = vadd.f32 %v982, %v991
      %v995 = vadd.f32 %v983, %v991
      %v996 = vadd.f32 %v984, %v991
      %v997 = vadd.f32 %v985, %v991
      %v998 = vadd.f32 %v986, %v991
      %v999 = vadd.f32 %v987, %v991
      %v1000 = vadd.f32 %v992, 3.0
      %v1001 = vadd.f32 %v993, 3.0
      %v1002 = vadd.f32 %v994, 3.0
      %v1003 = vadd.f32 %v995, 3.0
      %v1004 = vadd.f32 %v996, 3.0
      %v1005 = vadd.f32 %v997, 3.0
      %v1006 = vadd.f32 %v998, 3.0
      %v1007 = vadd.f32 %v999, 3.0
      %v1008 = vmax.f32 %v1000, 0.0
      %v1009 = vmax.f32 %v1001, 0.0
      %v1010 = vmax.f32 %v1002, 0.0
      %v1011 = vmax.f32 %v1003, 0.0
      %v1012 = vmax.f32 %v1004, 0.0
      %v1013 = vmax.f32 %v1005, 0.0
      %v1014 = vmax.f32 %v1006, 0.0
      %v1015 = vmax.f32 %v1007, 0.0
      %v1016 = vmin.f32 %v1008, 6.0
      %v1017 = vmin.f32 %v1009, 6.0
      %v1018 = vmin.f32 %v1010, 6.0
      %v1019 = vmin.f32 %v1011, 6.0
      %v1020 = vmin.f32 %v1012, 6.0
      %v1021 = vmin.f32 %v1013, 6.0
      %v1022 = vmin.f32 %v1014, 6.0
      %v1023 = vmin.f32 %v1015, 6.0
      %v1024 = vmul.f32 %v992, %v1016
      %v1025 = vmul.f32 %v993, %v1017
      %v1026 = vmul.f32 %v994, %v1018
      %v1027 = vmul.f32 %v995, %v1019
      %v1028 = vmul.f32 %v996, %v1020
      %v1029 = vmul.f32 %v997, %v1021
      %v1030 = vmul.f32 %v998, %v1022
      %v1031 = vmul.f32 %v999, %v1023
      %v1032 = vmul.f32 %v1024, 0.16666667
      %v1033 = vmul.f32 %v1025, 0.16666667
      %v1034 = vmul.f32 %v1026, 0.16666667
      %v1035 = vmul.f32 %v1027, 0.16666667
      %v1036 = vmul.f32 %v1028, 0.16666667
      %v1037 = vmul.f32 %v1029, 0.16666667
      %v1038 = vmul.f32 %v1030, 0.16666667
      %v1039 = vmul.f32 %v1031, 0.16666667
      %v1040 = vld [vmem:[%s5] sm:$0xff]
      %1041 = vst.msk [vmem:[#allocation2 + $0x10] sm:$0xff] %vm328, %v548
      %1042 = vst.msk [vmem:[#allocation2 + $0x18] sm:$0xff] %vm328, %v549
      %1043 = vst.msk [vmem:[#allocation2 + $0x20] sm:$0xff] %vm328, %v550
      %1044 = vst.msk [vmem:[#allocation2 + $0x28] sm:$0xff] %vm328, %v551
      %1045 = vst.msk [vmem:[#allocation2 + $0x30] sm:$0xff] %vm328, %v552
      %1046 = vst.msk [vmem:[#allocation2 + $0x38] sm:$0xff] %vm328, %v553
      %1047 = vst.msk [vmem:[#allocation2 + $0x40] sm:$0xff] %vm328, %v554
      %1048 = vst.msk [vmem:[#allocation2 + $0x48] sm:$0xff] %vm328, %v555
      %v1049 = vld [vmem:[#allocation2 + $0x7] sm:$0xff]
      %v1050 = vld [vmem:[#allocation2 + $0xf] sm:$0xff]
      %v1051 = vld [vmem:[#allocation2 + $0x17] sm:$0xff]
      %v1052 = vld [vmem:[#allocation2 + $0x1f] sm:$0xff]
      %v1053 = vld [vmem:[#allocation2 + $0x27] sm:$0xff]
      %v1054 = vld [vmem:[#allocation2 + $0x2f] sm:$0xff]
      %v1055 = vld [vmem:[#allocation2 + $0x37] sm:$0xff]
      %v1056 = vld [vmem:[#allocation2 + $0x3f] sm:$0xff]
      %v1057 = vlaneseq
      %v1058 = vshrl.u32 %v1057, 7
      %v1059 = vsub.s32 1, %v1058
      %v1060 = vrot.slane %v315, %v1059
      %v1061 = vmul.f32 %v1060, %v1049
      %v1062 = vmul.f32 %v1060, %v1050
      %v1063 = vmul.f32 %v1060, %v1051
      %v1064 = vmul.f32 %v1060, %v1052
      %v1065 = vmul.f32 %v1060, %v1053
      %v1066 = vmul.f32 %v1060, %v1054
      %v1067 = vmul.f32 %v1060, %v1055
      %v1068 = vmul.f32 %v1060, %v1056
      %v1069 = vmul.f32 %v1061, %v587
      %v1070 = vmul.f32 %v1062, %v592
      %v1071 = vmul.f32 %v1063, %v597
      %v1072 = vmul.f32 %v1064, %v602
      %v1073 = vmul.f32 %v1065, %v607
      %v1074 = vmul.f32 %v1066, %v612
      %v1075 = vmul.f32 %v1067, %v617
      %v1076 = vmul.f32 %v1068, %v622
      %v1077 = vld [vmem:[#allocation2 + $0x8] sm:$0xff]
      %v1078 = vld [vmem:[#allocation2 + $0x10] sm:$0xff]
      %v1079 = vld [vmem:[#allocation2 + $0x18] sm:$0xff]
      %v1080 = vld [vmem:[#allocation2 + $0x20] sm:$0xff]
      %v1081 = vld [vmem:[#allocation2 + $0x28] sm:$0xff]
      %v1082 = vld [vmem:[#allocation2 + $0x30] sm:$0xff]
      %v1083 = vld [vmem:[#allocation2 + $0x38] sm:$0xff]
      %v1084 = vld [vmem:[#allocation2 + $0x40] sm:$0xff]
      %v1085 = vlaneseq
      %v1086 = vshrl.u32 %v1085, 7
      %v1087 = vsub.s32 2, %v1086
      %v1088 = vrot.slane %v315, %v1087
      %v1089 = vmul.f32 %v1088, %v1077
      %v1090 = vmul.f32 %v1088, %v1078
      %v1091 = vmul.f32 %v1088, %v1079
      %v1092 = vmul.f32 %v1088, %v1080
      %v1093 = vmul.f32 %v1088, %v1081
      %v1094 = vmul.f32 %v1088, %v1082
      %v1095 = vmul.f32 %v1088, %v1083
      %v1096 = vmul.f32 %v1088, %v1084
      %v1097 = vadd.f32 %v1069, %v1089
      %v1098 = vadd.f32 %v1070, %v1090
      %v1099 = vadd.f32 %v1071, %v1091
      %v1100 = vadd.f32 %v1072, %v1092
      %v1101 = vadd.f32 %v1073, %v1093
      %v1102 = vadd.f32 %v1074, %v1094
      %v1103 = vadd.f32 %v1075, %v1095
      %v1104 = vadd.f32 %v1076, %v1096
      %v1105 = vld [vmem:[#allocation2 + $0x9] sm:$0xff]
      %v1106 = vld [vmem:[#allocation2 + $0x11] sm:$0xff]
      %v1107 = vld [vmem:[#allocation2 + $0x19] sm:$0xff]
      %v1108 = vld [vmem:[#allocation2 + $0x21] sm:$0xff]
      %v1109 = vld [vmem:[#allocation2 + $0x29] sm:$0xff]
      %v1110 = vld [vmem:[#allocation2 + $0x31] sm:$0xff]
      %v1111 = vld [vmem:[#allocation2 + $0x39] sm:$0xff]
      %v1112 = vld [vmem:[#allocation2 + $0x41] sm:$0xff]
      %v1113 = vlaneseq
      %v1114 = vshrl.u32 %v1113, 7
      %v1115 = vsub.s32 3, %v1114
      %v1116 = vrot.slane %v315, %v1115
      %v1117 = vmul.f32 %v1116, %v1105
      %v1118 = vmul.f32 %v1116, %v1106
      %v1119 = vmul.f32 %v1116, %v1107
      %v1120 = vmul.f32 %v1116, %v1108
      %v1121 = vmul.f32 %v1116, %v1109
      %v1122 = vmul.f32 %v1116, %v1110
      %v1123 = vmul.f32 %v1116, %v1111
      %v1124 = vmul.f32 %v1116, %v1112
      %v1125 = vmul.f32 %v1117, %v682
      %v1126 = vmul.f32 %v1118, %v686
      %v1127 = vmul.f32 %v1119, %v690
      %v1128 = vmul.f32 %v1120, %v694
      %v1129 = vmul.f32 %v1121, %v698
      %v1130 = vmul.f32 %v1122, %v702
      %v1131 = vmul.f32 %v1123, %v706
      %v1132 = vmul.f32 %v1124, %v710
      %v1133 = vadd.f32 %v1097, %v1125
      %v1134 = vadd.f32 %v1098, %v1126
      %v1135 = vadd.f32 %v1099, %v1127
      %v1136 = vadd.f32 %v1100, %v1128
      %v1137 = vadd.f32 %v1101, %v1129
      %v1138 = vadd.f32 %v1102, %v1130
      %v1139 = vadd.f32 %v1103, %v1131
      %v1140 = vadd.f32 %v1104, %v1132
      %v1141 = vld [vmem:[#allocation2 + $0x47] sm:$0xff]
      %v1142 = vlaneseq
      %v1143 = vshrl.u32 %v1142, 7
      %v1144 = vsub.s32 4, %v1143
      %v1145 = vrot.slane %v315, %v1144
      %v1146 = vmul.f32 %v1145, %v1050
      %v1147 = vmul.f32 %v1145, %v1051
      %v1148 = vmul.f32 %v1145, %v1052
      %v1149 = vmul.f32 %v1145, %v1053
      %v1150 = vmul.f32 %v1145, %v1054
      %v1151 = vmul.f32 %v1145, %v1055
      %v1152 = vmul.f32 %v1145, %v1056
      %v1153 = vmul.f32 %v1145, %v1141
      %v1154 = vmul.f32 %v1146, %v587
      %v1155 = vmul.f32 %v1147, %v592
      %v1156 = vmul.f32 %v1148, %v597
      %v1157 = vmul.f32 %v1149, %v602
      %v1158 = vmul.f32 %v1150, %v607
      %v1159 = vmul.f32 %v1151, %v612
      %v1160 = vmul.f32 %v1152, %v617
      %v1161 = vmul.f32 %v1153, %v622
      %v1162 = vadd.f32 %v1133, %v1154
      %v1163 = vadd.f32 %v1134, %v1155
      %v1164 = vadd.f32 %v1135, %v1156
      %v1165 = vadd.f32 %v1136, %v1157
      %v1166 = vadd.f32 %v1137, %v1158
      %v1167 = vadd.f32 %v1138, %v1159
      %v1168 = vadd.f32 %v1139, %v1160
      %v1169 = vadd.f32 %v1140, %v1161
      %v1170 = vld [vmem:[#allocation2 + $0x48] sm:$0xff]
      %v1171 = vlaneseq
      %v1172 = vshrl.u32 %v1171, 7
      %v1173 = vsub.s32 5, %v1172
      %v1174 = vrot.slane %v315, %v1173
      %v1175 = vmul.f32 %v1174, %v1078
      %v1176 = vmul.f32 %v1174, %v1079
      %v1177 = vmul.f32 %v1174, %v1080
      %v1178 = vmul.f32 %v1174, %v1081
      %v1179 = vmul.f32 %v1174, %v1082
      %v1180 = vmul.f32 %v1174, %v1083
      %v1181 = vmul.f32 %v1174, %v1084
      %v1182 = vmul.f32 %v1174, %v1170
      %v1183 = vadd.f32 %v1162, %v1175
      %v1184 = vadd.f32 %v1163, %v1176
      %v1185 = vadd.f32 %v1164, %v1177
      %v1186 = vadd.f32 %v1165, %v1178
      %v1187 = vadd.f32 %v1166, %v1179
      %v1188 = vadd.f32 %v1167, %v1180
      %v1189 = vadd.f32 %v1168, %v1181
      %v1190 = vadd.f32 %v1169, %v1182
      %v1191 = vld [vmem:[#allocation2 + $0x49] sm:$0xff]
      %v1192 = vlaneseq
      %v1193 = vshrl.u32 %v1192, 7
      %v1194 = vsub.s32 6, %v1193
      %v1195 = vrot.slane %v315, %v1194
      %v1196 = vmul.f32 %v1195, %v1106
      %v1197 = vmul.f32 %v1195, %v1107
      %v1198 = vmul.f32 %v1195, %v1108
      %v1199 = vmul.f32 %v1195, %v1109
      %v1200 = vmul.f32 %v1195, %v1110
      %v1201 = vmul.f32 %v1195, %v1111
      %v1202 = vmul.f32 %v1195, %v1112
      %v1203 = vmul.f32 %v1195, %v1191
      %v1204 = vmul.f32 %v1196, %v682
      %v1205 = vmul.f32 %v1197, %v686
      %v1206 = vmul.f32 %v1198, %v690
      %v1207 = vmul.f32 %v1199, %v694
      %v1208 = vmul.f32 %v1200, %v698
      %v1209 = vmul.f32 %v1201, %v702
      %v1210 = vmul.f32 %v1202, %v706
      %v1211 = vmul.f32 %v1203, %v710
      %v1212 = vadd.f32 %v1183, %v1204
      %v1213 = vadd.f32 %v1184, %v1205
      %v1214 = vadd.f32 %v1185, %v1206
      %v1215 = vadd.f32 %v1186, %v1207
      %v1216 = vadd.f32 %v1187, %v1208
      %v1217 = vadd.f32 %v1188, %v1209
      %v1218 = vadd.f32 %v1189, %v1210
      %v1219 = vadd.f32 %v1190, %v1211
      %v1220 = vld [vmem:[#allocation2 + $0x4f] sm:$0xff]
      %v1221 = vlaneseq
      %v1222 = vshrl.u32 %v1221, 7
      %v1223 = vsub.s32 7, %v1222
      %v1224 = vrot.slane %v315, %v1223
      %v1225 = vmul.f32 %v1224, %v1051
      %v1226 = vmul.f32 %v1224, %v1052
      %v1227 = vmul.f32 %v1224, %v1053
      %v1228 = vmul.f32 %v1224, %v1054
      %v1229 = vmul.f32 %v1224, %v1055
      %v1230 = vmul.f32 %v1224, %v1056
      %v1231 = vmul.f32 %v1224, %v1141
      %v1232 = vmul.f32 %v1224, %v1220
      %v1233 = vmul.f32 %v1225, %v587
      %v1234 = vmul.f32 %v1226, %v592
      %v1235 = vmul.f32 %v1227, %v597
      %v1236 = vmul.f32 %v1228, %v602
      %v1237 = vmul.f32 %v1229, %v607
      %v1238 = vmul.f32 %v1230, %v612
      %v1239 = vmul.f32 %v1231, %v617
      %v1240 = vmul.f32 %v1232, %v622
      %v1241 = vadd.f32 %v1212, %v1233
      %v1242 = vadd.f32 %v1213, %v1234
      %v1243 = vadd.f32 %v1214, %v1235
      %v1244 = vadd.f32 %v1215, %v1236
      %v1245 = vadd.f32 %v1216, %v1237
      %v1246 = vadd.f32 %v1217, %v1238
      %v1247 = vadd.f32 %v1218, %v1239
      %v1248 = vadd.f32 %v1219, %v1240
      %v1249 = vld [vmem:[#allocation2 + $0x50] sm:$0xff]
      %v1250 = vlaneseq
      %v1251 = vshrl.u32 %v1250, 7
      %v1252 = vsub.s32 0, %v1251
      %v1253 = vrot.slane %v316, %v1252
      %v1254 = vmul.f32 %v1253, %v1079
      %v1255 = vmul.f32 %v1253, %v1080
      %v1256 = vmul.f32 %v1253, %v1081
      %v1257 = vmul.f32 %v1253, %v1082
      %v1258 = vmul.f32 %v1253, %v1083
      %v1259 = vmul.f32 %v1253, %v1084
      %v1260 = vmul.f32 %v1253, %v1170
      %v1261 = vmul.f32 %v1253, %v1249
      %v1262 = vadd.f32 %v1241, %v1254
      %v1263 = vadd.f32 %v1242, %v1255
      %v1264 = vadd.f32 %v1243, %v1256
      %v1265 = vadd.f32 %v1244, %v1257
      %v1266 = vadd.f32 %v1245, %v1258
      %v1267 = vadd.f32 %v1246, %v1259
      %v1268 = vadd.f32 %v1247, %v1260
      %v1269 = vadd.f32 %v1248, %v1261
      %v1270 = vld [vmem:[#allocation2 + $0x51] sm:$0xff]
      %v1271 = vlaneseq
      %v1272 = vshrl.u32 %v1271, 7
      %v1273 = vsub.s32 1, %v1272
      %v1274 = vrot.slane %v316, %v1273
      %v1275 = vmul.f32 %v1274, %v1107
      %v1276 = vmul.f32 %v1274, %v1108
      %v1277 = vmul.f32 %v1274, %v1109
      %v1278 = vmul.f32 %v1274, %v1110
      %v1279 = vmul.f32 %v1274, %v1111
      %v1280 = vmul.f32 %v1274, %v1112
      %v1281 = vmul.f32 %v1274, %v1191
      %v1282 = vmul.f32 %v1274, %v1270
      %v1283 = vmul.f32 %v1275, %v682
      %v1284 = vmul.f32 %v1276, %v686
      %v1285 = vmul.f32 %v1277, %v690
      %v1286 = vmul.f32 %v1278, %v694
      %v1287 = vmul.f32 %v1279, %v698
      %v1288 = vmul.f32 %v1280, %v702
      %v1289 = vmul.f32 %v1281, %v706
      %v1290 = vmul.f32 %v1282, %v710
      %v1291 = vadd.f32 %v1262, %v1283
      %v1292 = vadd.f32 %v1263, %v1284
      %v1293 = vadd.f32 %v1264, %v1285
      %v1294 = vadd.f32 %v1265, %v1286
      %v1295 = vadd.f32 %v1266, %v1287
      %v1296 = vadd.f32 %v1267, %v1288
      %v1297 = vadd.f32 %v1268, %v1289
      %v1298 = vadd.f32 %v1269, %v1290
      %v1299 = vsel %vm328, %v1291, 0.0
      %v1300 = vsel %vm328, %v1292, 0.0
      %v1301 = vadd.f32 %v1299, %v1300
      %v1302 = vsel %vm328, %v1293, 0.0
      %v1303 = vadd.f32 %v1301, %v1302
      %v1304 = vsel %vm328, %v1294, 0.0
      %v1305 = vadd.f32 %v1303, %v1304
      %v1306 = vsel %vm328, %v1295, 0.0
      %v1307 = vadd.f32 %v1305, %v1306
      %v1308 = vsel %vm328, %v1296, 0.0
      %v1309 = vadd.f32 %v1307, %v1308
      %v1310 = vsel %vm328, %v1297, 0.0
      %v1311 = vadd.f32 %v1309, %v1310
      %v1312 = vsel %vm328, %v1298, 0.0
      %v1313 = vadd.f32 %v1311, %v1312
      %1314 = vadd.xlane.f32.xlu0 %v1313
      %v1315 = vpop.xlane.xlu0 %1314
      %v1316 = vrot.slane %v1315, 4
      %v1317 = vadd.f32 %v1315, %v1316
      %v1318 = vrot.slane %v1317, 2
      %v1319 = vadd.f32 %v1317, %v1318
      %v1320 = vrot.slane %v1319, 1
      %v1321 = vadd.f32 %v1319, %v1320
      %s1322 = vtos %v1321
      %v1323 = vmul.f32 %v1291, %v1291
      %v1324 = vmul.f32 %v1292, %v1292
      %v1325 = vmul.f32 %v1293, %v1293
      %v1326 = vmul.f32 %v1294, %v1294
      %v1327 = vmul.f32 %v1295, %v1295
      %v1328 = vmul.f32 %v1296, %v1296
      %v1329 = vmul.f32 %v1297, %v1297
      %v1330 = vmul.f32 %v1298, %v1298
      %v1331 = vsel %vm328, %v1323, 0.0
      %v1332 = vsel %vm328, %v1324, 0.0
      %v1333 = vadd.f32 %v1331, %v1332
      %v1334 = vsel %vm328, %v1325, 0.0
      %v1335 = vadd.f32 %v1333, %v1334
      %v1336 = vsel %vm328, %v1326, 0.0
      %v1337 = vadd.f32 %v1335, %v1336
      %v1338 = vsel %vm328, %v1327, 0.0
      %v1339 = vadd.f32 %v1337, %v1338
      %v1340 = vsel %vm328, %v1328, 0.0
      %v1341 = vadd.f32 %v1339, %v1340
      %v1342 = vsel %vm328, %v1329, 0.0
      %v1343 = vadd.f32 %v1341, %v1342
      %v1344 = vsel %vm328, %v1330, 0.0
      %v1345 = vadd.f32 %v1343, %v1344
      %1346 = vadd.xlane.f32.xlu0 %v1345
      %v1347 = vpop.xlane.xlu0 %1346
      %v1348 = vrot.slane %v1347, 4
      %v1349 = vadd.f32 %v1347, %v1348
      %v1350 = vrot.slane %v1349, 2
      %v1351 = vadd.f32 %v1349, %v1350
      %v1352 = vrot.slane %v1351, 1
      %v1353 = vadd.f32 %v1351, %v1352
      %s1354 = vtos %v1353
      %s1355 = smul.f32 %s1322, 0.001953125
      %s1356 = smul.f32 %s1354, 0.001953125
      %s1357 = smul.f32 %s1355, %s1355
      %s1358 = ssub.f32 %s1356, %s1357
      %s1359 = sadd.f32 %s1358, 1e-05
      %v1360 = vstv %s1359
      %v1361 = vrsqrt.pop %v1360
      %s1362 = vtos %v1361
      %v1363 = vstv %s1362
      %v1364 = vmul.f32 %v318, %v1363
      %v1365 = vstv %s1355
      %v1366 = vmul.f32 %v1365, %v1364
      %v1367 = vsub.f32 %v319, %v1366
      %v1368 = vlaneseq
      %v1369 = vshrl.u32 %v1368, 7
      %v1370 = vsub.s32 2, %v1369
      %v1371 = vrot.slane %v1364, %v1370
      %v1372 = vmul.f32 %v1291, %v1371
      %v1373 = vmul.f32 %v1292, %v1371
      %v1374 = vmul.f32 %v1293, %v1371
      %v1375 = vmul.f32 %v1294, %v1371
      %v1376 = vmul.f32 %v1295, %v1371
      %v1377 = vmul.f32 %v1296, %v1371
      %v1378 = vmul.f32 %v1297, %v1371
      %v1379 = vmul.f32 %v1298, %v1371
      %v1380 = vlaneseq
      %v1381 = vshrl.u32 %v1380, 7
      %v1382 = vsub.s32 2, %v1381
      %v1383 = vrot.slane %v1367, %v1382
      %v1384 = vadd.f32 %v1372, %v1383
      %v1385 = vadd.f32 %v1373, %v1383
      %v1386 = vadd.f32 %v1374, %v1383
      %v1387 = vadd.f32 %v1375, %v1383
      %v1388 = vadd.f32 %v1376, %v1383
      %v1389 = vadd.f32 %v1377, %v1383
      %v1390 = vadd.f32 %v1378, %v1383
      %v1391 = vadd.f32 %v1379, %v1383
      %1392 = vst.msk [vmem:[#allocation2 + $0x10] sm:$0xff] %vm328, %v1384
      %1393 = vst.msk [vmem:[#allocation2 + $0x18] sm:$0xff] %vm328, %v1385
      %1394 = vst.msk [vmem:[#allocation2 + $0x20] sm:$0xff] %vm328, %v1386
      %1395 = vst.msk [vmem:[#allocation2 + $0x28] sm:$0xff] %vm328, %v1387
      %1396 = vst.msk [vmem:[#allocation2 + $0x30] sm:$0xff] %vm328, %v1388
      %1397 = vst.msk [vmem:[#allocation2 + $0x38] sm:$0xff] %vm328, %v1389
      %1398 = vst.msk [vmem:[#allocation2 + $0x40] sm:$0xff] %vm328, %v1390
      %1399 = vst.msk [vmem:[#allocation2 + $0x48] sm:$0xff] %vm328, %v1391
      %v1400 = vld [vmem:[#allocation2 + $0x7] sm:$0xff]
      %v1401 = vld [vmem:[#allocation2 + $0xf] sm:$0xff]
      %v1402 = vld [vmem:[#allocation2 + $0x17] sm:$0xff]
      %v1403 = vld [vmem:[#allocation2 + $0x1f] sm:$0xff]
      %v1404 = vld [vmem:[#allocation2 + $0x27] sm:$0xff]
      %v1405 = vld [vmem:[#allocation2 + $0x2f] sm:$0xff]
      %v1406 = vld [vmem:[#allocation2 + $0x37] sm:$0xff]
      %v1407 = vld [vmem:[#allocation2 + $0x3f] sm:$0xff]
      %v1408 = vlaneseq
      %v1409 = vshrl.u32 %v1408, 7
      %v1410 = vsub.s32 2, %v1409
      %v1411 = vrot.slane %v316, %v1410
      %v1412 = vmul.f32 %v1411, %v1400
      %v1413 = vmul.f32 %v1411, %v1401
      %v1414 = vmul.f32 %v1411, %v1402
      %v1415 = vmul.f32 %v1411, %v1403
      %v1416 = vmul.f32 %v1411, %v1404
      %v1417 = vmul.f32 %v1411, %v1405
      %v1418 = vmul.f32 %v1411, %v1406
      %v1419 = vmul.f32 %v1411, %v1407
      %v1420 = vmul.f32 %v1412, %v587
      %v1421 = vmul.f32 %v1413, %v592
      %v1422 = vmul.f32 %v1414, %v597
      %v1423 = vmul.f32 %v1415, %v602
      %v1424 = vmul.f32 %v1416, %v607
      %v1425 = vmul.f32 %v1417, %v612
      %v1426 = vmul.f32 %v1418, %v617
      %v1427 = vmul.f32 %v1419, %v622
      %v1428 = vld [vmem:[#allocation2 + $0x8] sm:$0xff]
      %v1429 = vld [vmem:[#allocation2 + $0x10] sm:$0xff]
      %v1430 = vld [vmem:[#allocation2 + $0x18] sm:$0xff]
      %v1431 = vld [vmem:[#allocation2 + $0x20] sm:$0xff]
      %v1432 = vld [vmem:[#allocation2 + $0x28] sm:$0xff]
      %v1433 = vld [vmem:[#allocation2 + $0x30] sm:$0xff]
      %v1434 = vld [vmem:[#allocation2 + $0x38] sm:$0xff]
      %v1435 = vld [vmem:[#allocation2 + $0x40] sm:$0xff]
      %v1436 = vlaneseq
      %v1437 = vshrl.u32 %v1436, 7
      %v1438 = vsub.s32 3, %v1437
      %v1439 = vrot.slane %v316, %v1438
      %v1440 = vmul.f32 %v1439, %v1428
      %v1441 = vmul.f32 %v1439, %v1429
      %v1442 = vmul.f32 %v1439, %v1430
      %v1443 = vmul.f32 %v1439, %v1431
      %v1444 = vmul.f32 %v1439, %v1432
      %v1445 = vmul.f32 %v1439, %v1433
      %v1446 = vmul.f32 %v1439, %v1434
      %v1447 = vmul.f32 %v1439, %v1435
      %v1448 = vadd.f32 %v1420, %v1440
      %v1449 = vadd.f32 %v1421, %v1441
      %v1450 = vadd.f32 %v1422, %v1442
      %v1451 = vadd.f32 %v1423, %v1443
      %v1452 = vadd.f32 %v1424, %v1444
      %v1453 = vadd.f32 %v1425, %v1445
      %v1454 = vadd.f32 %v1426, %v1446
      %v1455 = vadd.f32 %v1427, %v1447
      %v1456 = vld [vmem:[#allocation2 + $0x9] sm:$0xff]
      %v1457 = vld [vmem:[#allocation2 + $0x11] sm:$0xff]
      %v1458 = vld [vmem:[#allocation2 + $0x19] sm:$0xff]
      %v1459 = vld [vmem:[#allocation2 + $0x21] sm:$0xff]
      %v1460 = vld [vmem:[#allocation2 + $0x29] sm:$0xff]
      %v1461 = vld [vmem:[#allocation2 + $0x31] sm:$0xff]
      %v1462 = vld [vmem:[#allocation2 + $0x39] sm:$0xff]
      %v1463 = vld [vmem:[#allocation2 + $0x41] sm:$0xff]
      %v1464 = vlaneseq
      %v1465 = vshrl.u32 %v1464, 7
      %v1466 = vsub.s32 4, %v1465
      %v1467 = vrot.slane %v316, %v1466
      %v1468 = vmul.f32 %v1467, %v1456
      %v1469 = vmul.f32 %v1467, %v1457
      %v1470 = vmul.f32 %v1467, %v1458
      %v1471 = vmul.f32 %v1467, %v1459
      %v1472 = vmul.f32 %v1467, %v1460
      %v1473 = vmul.f32 %v1467, %v1461
      %v1474 = vmul.f32 %v1467, %v1462
      %v1475 = vmul.f32 %v1467, %v1463
      %v1476 = vmul.f32 %v1468, %v682
      %v1477 = vmul.f32 %v1469, %v686
      %v1478 = vmul.f32 %v1470, %v690
      %v1479 = vmul.f32 %v1471, %v694
      %v1480 = vmul.f32 %v1472, %v698
      %v1481 = vmul.f32 %v1473, %v702
      %v1482 = vmul.f32 %v1474, %v706
      %v1483 = vmul.f32 %v1475, %v710
      %v1484 = vadd.f32 %v1448, %v1476
      %v1485 = vadd.f32 %v1449, %v1477
      %v1486 = vadd.f32 %v1450, %v1478
      %v1487 = vadd.f32 %v1451, %v1479
      %v1488 = vadd.f32 %v1452, %v1480
      %v1489 = vadd.f32 %v1453, %v1481
      %v1490 = vadd.f32 %v1454, %v1482
      %v1491 = vadd.f32 %v1455, %v1483
      %v1492 = vld [vmem:[#allocation2 + $0x47] sm:$0xff]
      %v1493 = vlaneseq
      %v1494 = vshrl.u32 %v1493, 7
      %v1495 = vsub.s32 5, %v1494
      %v1496 = vrot.slane %v316, %v1495
      %v1497 = vmul.f32 %v1496, %v1401
      %v1498 = vmul.f32 %v1496, %v1402
      %v1499 = vmul.f32 %v1496, %v1403
      %v1500 = vmul.f32 %v1496, %v1404
      %v1501 = vmul.f32 %v1496, %v1405
      %v1502 = vmul.f32 %v1496, %v1406
      %v1503 = vmul.f32 %v1496, %v1407
      %v1504 = vmul.f32 %v1496, %v1492
      %v1505 = vmul.f32 %v1497, %v587
      %v1506 = vmul.f32 %v1498, %v592
      %v1507 = vmul.f32 %v1499, %v597
      %v1508 = vmul.f32 %v1500, %v602
      %v1509 = vmul.f32 %v1501, %v607
      %v1510 = vmul.f32 %v1502, %v612
      %v1511 = vmul.f32 %v1503, %v617
      %v1512 = vmul.f32 %v1504, %v622
      %v1513 = vadd.f32 %v1484, %v1505
      %v1514 = vadd.f32 %v1485, %v1506
      %v1515 = vadd.f32 %v1486, %v1507
      %v1516 = vadd.f32 %v1487, %v1508
      %v1517 = vadd.f32 %v1488, %v1509
      %v1518 = vadd.f32 %v1489, %v1510
      %v1519 = vadd.f32 %v1490, %v1511
      %v1520 = vadd.f32 %v1491, %v1512
      %v1521 = vld [vmem:[#allocation2 + $0x48] sm:$0xff]
      %v1522 = vlaneseq
      %v1523 = vshrl.u32 %v1522, 7
      %v1524 = vsub.s32 6, %v1523
      %v1525 = vrot.slane %v316, %v1524
      %v1526 = vmul.f32 %v1525, %v1429
      %v1527 = vmul.f32 %v1525, %v1430
      %v1528 = vmul.f32 %v1525, %v1431
      %v1529 = vmul.f32 %v1525, %v1432
      %v1530 = vmul.f32 %v1525, %v1433
      %v1531 = vmul.f32 %v1525, %v1434
      %v1532 = vmul.f32 %v1525, %v1435
      %v1533 = vmul.f32 %v1525, %v1521
      %v1534 = vadd.f32 %v1513, %v1526
      %v1535 = vadd.f32 %v1514, %v1527
      %v1536 = vadd.f32 %v1515, %v1528
      %v1537 = vadd.f32 %v1516, %v1529
      %v1538 = vadd.f32 %v1517, %v1530
      %v1539 = vadd.f32 %v1518, %v1531
      %v1540 = vadd.f32 %v1519, %v1532
      %v1541 = vadd.f32 %v1520, %v1533
      %v1542 = vld [vmem:[#allocation2 + $0x49] sm:$0xff]
      %v1543 = vlaneseq
      %v1544 = vshrl.u32 %v1543, 7
      %v1545 = vsub.s32 7, %v1544
      %v1546 = vrot.slane %v316, %v1545
      %v1547 = vmul.f32 %v1546, %v1457
      %v1548 = vmul.f32 %v1546, %v1458
      %v1549 = vmul.f32 %v1546, %v1459
      %v1550 = vmul.f32 %v1546, %v1460
      %v1551 = vmul.f32 %v1546, %v1461
      %v1552 = vmul.f32 %v1546, %v1462
      %v1553 = vmul.f32 %v1546, %v1463
      %v1554 = vmul.f32 %v1546, %v1542
      %v1555 = vmul.f32 %v1547, %v682
      %v1556 = vmul.f32 %v1548, %v686
      %v1557 = vmul.f32 %v1549, %v690
      %v1558 = vmul.f32 %v1550, %v694
      %v1559 = vmul.f32 %v1551, %v698
      %v1560 = vmul.f32 %v1552, %v702
      %v1561 = vmul.f32 %v1553, %v706
      %v1562 = vmul.f32 %v1554, %v710
      %v1563 = vadd.f32 %v1534, %v1555
      %v1564 = vadd.f32 %v1535, %v1556
      %v1565 = vadd.f32 %v1536, %v1557
      %v1566 = vadd.f32 %v1537, %v1558
      %v1567 = vadd.f32 %v1538, %v1559
      %v1568 = vadd.f32 %v1539, %v1560
      %v1569 = vadd.f32 %v1540, %v1561
      %v1570 = vadd.f32 %v1541, %v1562
      %v1571 = vld [vmem:[#allocation2 + $0x4f] sm:$0xff]
      %v1572 = vlaneseq
      %v1573 = vshrl.u32 %v1572, 7
      %v1574 = vsub.s32 0, %v1573
      %v1575 = vrot.slane %v317, %v1574
      %v1576 = vmul.f32 %v1575, %v1402
      %v1577 = vmul.f32 %v1575, %v1403
      %v1578 = vmul.f32 %v1575, %v1404
      %v1579 = vmul.f32 %v1575, %v1405
      %v1580 = vmul.f32 %v1575, %v1406
      %v1581 = vmul.f32 %v1575, %v1407
      %v1582 = vmul.f32 %v1575, %v1492
      %v1583 = vmul.f32 %v1575, %v1571
      %v1584 = vmul.f32 %v1576, %v587
      %v1585 = vmul.f32 %v1577, %v592
      %v1586 = vmul.f32 %v1578, %v597
      %v1587 = vmul.f32 %v1579, %v602
      %v1588 = vmul.f32 %v1580, %v607
      %v1589 = vmul.f32 %v1581, %v612
      %v1590 = vmul.f32 %v1582, %v617
      %v1591 = vmul.f32 %v1583, %v622
      %v1592 = vadd.f32 %v1563, %v1584
      %v1593 = vadd.f32 %v1564, %v1585
      %v1594 = vadd.f32 %v1565, %v1586
      %v1595 = vadd.f32 %v1566, %v1587
      %v1596 = vadd.f32 %v1567, %v1588
      %v1597 = vadd.f32 %v1568, %v1589
      %v1598 = vadd.f32 %v1569, %v1590
      %v1599 = vadd.f32 %v1570, %v1591
      %v1600 = vld [vmem:[#allocation2 + $0x50] sm:$0xff]
      %v1601 = vlaneseq
      %v1602 = vshrl.u32 %v1601, 7
      %v1603 = vsub.s32 1, %v1602
      %v1604 = vrot.slane %v317, %v1603
      %v1605 = vmul.f32 %v1604, %v1430
      %v1606 = vmul.f32 %v1604, %v1431
      %v1607 = vmul.f32 %v1604, %v1432
      %v1608 = vmul.f32 %v1604, %v1433
      %v1609 = vmul.f32 %v1604, %v1434
      %v1610 = vmul.f32 %v1604, %v1435
      %v1611 = vmul.f32 %v1604, %v1521
      %v1612 = vmul.f32 %v1604, %v1600
      %v1613 = vadd.f32 %v1592, %v1605
      %v1614 = vadd.f32 %v1593, %v1606
      %v1615 = vadd.f32 %v1594, %v1607
      %v1616 = vadd.f32 %v1595, %v1608
      %v1617 = vadd.f32 %v1596, %v1609
      %v1618 = vadd.f32 %v1597, %v1610
      %v1619 = vadd.f32 %v1598, %v1611
      %v1620 = vadd.f32 %v1599, %v1612
      %v1621 = vld [vmem:[#allocation2 + $0x51] sm:$0xff]
      %v1622 = vlaneseq
      %v1623 = vshrl.u32 %v1622, 7
      %v1624 = vsub.s32 2, %v1623
      %v1625 = vrot.slane %v317, %v1624
      %v1626 = vmul.f32 %v1625, %v1458
      %v1627 = vmul.f32 %v1625, %v1459
      %v1628 = vmul.f32 %v1625, %v1460
      %v1629 = vmul.f32 %v1625, %v1461
      %v1630 = vmul.f32 %v1625, %v1462
      %v1631 = vmul.f32 %v1625, %v1463
      %v1632 = vmul.f32 %v1625, %v1542
      %v1633 = vmul.f32 %v1625, %v1621
      %v1634 = vmul.f32 %v1626, %v682
      %v1635 = vmul.f32 %v1627, %v686
      %v1636 = vmul.f32 %v1628, %v690
      %v1637 = vmul.f32 %v1629, %v694
      %v1638 = vmul.f32 %v1630, %v698
      %v1639 = vmul.f32 %v1631, %v702
      %v1640 = vmul.f32 %v1632, %v706
      %v1641 = vmul.f32 %v1633, %v710
      %v1642 = vadd.f32 %v1613, %v1634
      %v1643 = vadd.f32 %v1614, %v1635
      %v1644 = vadd.f32 %v1615, %v1636
      %v1645 = vadd.f32 %v1616, %v1637
      %v1646 = vadd.f32 %v1617, %v1638
      %v1647 = vadd.f32 %v1618, %v1639
      %v1648 = vadd.f32 %v1619, %v1640
      %v1649 = vadd.f32 %v1620, %v1641
      %v1650 = vsel %vm328, %v1642, 0.0
      %v1651 = vsel %vm328, %v1643, 0.0
      %v1652 = vadd.f32 %v1650, %v1651
      %v1653 = vsel %vm328, %v1644, 0.0
      %v1654 = vadd.f32 %v1652, %v1653
      %v1655 = vsel %vm328, %v1645, 0.0
      %v1656 = vadd.f32 %v1654, %v1655
      %v1657 = vsel %vm328, %v1646, 0.0
      %v1658 = vadd.f32 %v1656, %v1657
      %v1659 = vsel %vm328, %v1647, 0.0
      %v1660 = vadd.f32 %v1658, %v1659
      %v1661 = vsel %vm328, %v1648, 0.0
      %v1662 = vadd.f32 %v1660, %v1661
      %v1663 = vsel %vm328, %v1649, 0.0
      %v1664 = vadd.f32 %v1662, %v1663
      %1665 = vadd.xlane.f32.xlu0 %v1664
      %v1666 = vpop.xlane.xlu0 %1665
      %v1667 = vrot.slane %v1666, 4
      %v1668 = vadd.f32 %v1666, %v1667
      %v1669 = vrot.slane %v1668, 2
      %v1670 = vadd.f32 %v1668, %v1669
      %v1671 = vrot.slane %v1670, 1
      %v1672 = vadd.f32 %v1670, %v1671
      %s1673 = vtos %v1672
      %v1674 = vmul.f32 %v1642, %v1642
      %v1675 = vmul.f32 %v1643, %v1643
      %v1676 = vmul.f32 %v1644, %v1644
      %v1677 = vmul.f32 %v1645, %v1645
      %v1678 = vmul.f32 %v1646, %v1646
      %v1679 = vmul.f32 %v1647, %v1647
      %v1680 = vmul.f32 %v1648, %v1648
      %v1681 = vmul.f32 %v1649, %v1649
      %v1682 = vsel %vm328, %v1674, 0.0
      %v1683 = vsel %vm328, %v1675, 0.0
      %v1684 = vadd.f32 %v1682, %v1683
      %v1685 = vsel %vm328, %v1676, 0.0
      %v1686 = vadd.f32 %v1684, %v1685
      %v1687 = vsel %vm328, %v1677, 0.0
      %v1688 = vadd.f32 %v1686, %v1687
      %v1689 = vsel %vm328, %v1678, 0.0
      %v1690 = vadd.f32 %v1688, %v1689
      %v1691 = vsel %vm328, %v1679, 0.0
      %v1692 = vadd.f32 %v1690, %v1691
      %v1693 = vsel %vm328, %v1680, 0.0
      %v1694 = vadd.f32 %v1692, %v1693
      %v1695 = vsel %vm328, %v1681, 0.0
      %v1696 = vadd.f32 %v1694, %v1695
      %1697 = vadd.xlane.f32.xlu0 %v1696
      %v1698 = vpop.xlane.xlu0 %1697
      %v1699 = vrot.slane %v1698, 4
      %v1700 = vadd.f32 %v1698, %v1699
      %v1701 = vrot.slane %v1700, 2
      %v1702 = vadd.f32 %v1700, %v1701
      %v1703 = vrot.slane %v1702, 1
      %v1704 = vadd.f32 %v1702, %v1703
      %s1705 = vtos %v1704
      %s1706 = smul.f32 %s1673, 0.001953125
      %s1707 = smul.f32 %s1705, 0.001953125
      %s1708 = smul.f32 %s1706, %s1706
      %s1709 = ssub.f32 %s1707, %s1708
      %s1710 = sadd.f32 %s1709, 1e-05
      %v1711 = vstv %s1710
      %v1712 = vrsqrt.pop %v1711
      %s1713 = vtos %v1712
      %v1714 = vstv %s1713
      %v1715 = vmul.f32 %v318, %v1714
      %v1716 = vstv %s1706
      %v1717 = vmul.f32 %v1716, %v1715
      %v1718 = vsub.f32 %v319, %v1717
      %v1719 = vlaneseq
      %v1720 = vshrl.u32 %v1719, 7
      %v1721 = vsub.s32 3, %v1720
      %v1722 = vrot.slane %v1715, %v1721
      %v1723 = vmul.f32 %v1642, %v1722
      %v1724 = vmul.f32 %v1643, %v1722
      %v1725 = vmul.f32 %v1644, %v1722
      %v1726 = vmul.f32 %v1645, %v1722
      %v1727 = vmul.f32 %v1646, %v1722
      %v1728 = vmul.f32 %v1647, %v1722
      %v1729 = vmul.f32 %v1648, %v1722
      %v1730 = vmul.f32 %v1649, %v1722
      %v1731 = vlaneseq
      %v1732 = vshrl.u32 %v1731, 7
      %v1733 = vsub.s32 3, %v1732
      %v1734 = vrot.slane %v1718, %v1733
      %v1735 = vadd.f32 %v1723, %v1734
      %v1736 = vadd.f32 %v1724, %v1734
      %v1737 = vadd.f32 %v1725, %v1734
      %v1738 = vadd.f32 %v1726, %v1734
      %v1739 = vadd.f32 %v1727, %v1734
      %v1740 = vadd.f32 %v1728, %v1734
      %v1741 = vadd.f32 %v1729, %v1734
      %v1742 = vadd.f32 %v1730, %v1734
      %v1743 = vadd.f32 %v1735, 3.0
      %v1744 = vadd.f32 %v1736, 3.0
      %v1745 = vadd.f32 %v1737, 3.0
      %v1746 = vadd.f32 %v1738, 3.0
      %v1747 = vadd.f32 %v1739, 3.0
      %v1748 = vadd.f32 %v1740, 3.0
      %v1749 = vadd.f32 %v1741, 3.0
      %v1750 = vadd.f32 %v1742, 3.0
      %v1751 = vmax.f32 %v1743, 0.0
      %v1752 = vmax.f32 %v1744, 0.0
      %v1753 = vmax.f32 %v1745, 0.0
      %v1754 = vmax.f32 %v1746, 0.0
      %v1755 = vmax.f32 %v1747, 0.0
      %v1756 = vmax.f32 %v1748, 0.0
      %v1757 = vmax.f32 %v1749, 0.0
      %v1758 = vmax.f32 %v1750, 0.0
      %v1759 = vmin.f32 %v1751, 6.0
      %v1760 = vmin.f32 %v1752, 6.0
      %v1761 = vmin.f32 %v1753, 6.0
      %v1762 = vmin.f32 %v1754, 6.0
      %v1763 = vmin.f32 %v1755, 6.0
      %v1764 = vmin.f32 %v1756, 6.0
      %v1765 = vmin.f32 %v1757, 6.0
      %v1766 = vmin.f32 %v1758, 6.0
      %v1767 = vmul.f32 %v1735, %v1759
      %v1768 = vmul.f32 %v1736, %v1760
      %v1769 = vmul.f32 %v1737, %v1761
      %v1770 = vmul.f32 %v1738, %v1762
      %v1771 = vmul.f32 %v1739, %v1763
      %v1772 = vmul.f32 %v1740, %v1764
      %v1773 = vmul.f32 %v1741, %v1765
      %v1774 = vmul.f32 %v1742, %v1766
      %v1775 = vmul.f32 %v1767, 0.16666667
      %v1776 = vmul.f32 %v1768, 0.16666667
      %v1777 = vmul.f32 %v1769, 0.16666667
      %v1778 = vmul.f32 %v1770, 0.16666667
      %v1779 = vmul.f32 %v1771, 0.16666667
      %v1780 = vmul.f32 %v1772, 0.16666667
      %v1781 = vmul.f32 %v1773, 0.16666667
      %v1782 = vmul.f32 %v1774, 0.16666667
      %v1783 = vld [vmem:[%s5 + $0x8] sm:$0xff]
      %v1785 = vsel %vm328, %v1775, 0
      %v1788 = vsel %vm328, %v1776, 0
      %v1791 = vsel %vm328, %v1777, 0
      %v1794 = vsel %vm328, %v1778, 0
      %v1797 = vsel %vm328, %v1779, 0
      %v1800 = vsel %vm328, %v1780, 0
      %v1803 = vsel %vm328, %v1781, 0
      %v1806 = vsel %vm328, %v1782, 0
      %1808 = vmatprep.subr.mxu0 0.0
      %1809 = vmatpush1.msra.mxu0 %v1783
      %1810 = vmatprep.subr.mxu0 0.0
      %1811 = vmatpush1.msra.mxu0 0.0
      %1812 = vmatprep.subr.mxu0 0.0
      %1813 = vmatpush1.msra.mxu0 0.0
      %1814 = vmatprep.subr.mxu0 0.0
      %1815 = vmatpush1.msra.mxu0 0.0
      %1816 = vmatprep.subr.mxu0 0.0
      %1817 = vmatpush1.msra.mxu0 0.0
      %1818 = vmatprep.subr.mxu0 0.0
      %1819 = vmatpush1.msra.mxu0 0.0
      %1820 = vmatprep.subr.mxu0 0.0
      %1821 = vmatpush1.msra.mxu0 0.0
      %1822 = vmatprep.subr.mxu0 0.0
      %1823 = vmatpush1.msra.mxu0 0.0
      %1824 = vmatprep.subr.mxu0 0.0
      %1825 = vmatpush1.msra.mxu0 0.0
      %1826 = vmatprep.subr.mxu0 0.0
      %1827 = vmatpush1.msra.mxu0 0.0
      %1828 = vmatprep.subr.mxu0 0.0
      %1829 = vmatpush1.msra.mxu0 0.0
      %1830 = vmatprep.subr.mxu0 0.0
      %1831 = vmatpush1.msra.mxu0 0.0
      %1832 = vmatprep.subr.mxu0 0.0
      %1833 = vmatpush1.msra.mxu0 0.0
      %1834 = vmatprep.subr.mxu0 0.0
      %1835 = vmatpush1.msra.mxu0 0.0
      %1836 = vmatprep.subr.mxu0 0.0
      %1837 = vmatpush1.msra.mxu0 0.0
      %1838 = vmatprep.subr.mxu0 0.0
      %1839 = vmatpush1.msra.mxu0 0.0
      %1840 = vmatprep.subr.mxu0 0.0
      %1841 = vmatpush1.msra.mxu0 0.0
      %1842 = vmatprep.subr.mxu0 0.0
      %1843 = vmatpush1.msra.mxu0 0.0
      %1844 = vmatprep.subr.mxu0 0.0
      %1845 = vmatpush1.msra.mxu0 0.0
      %1846 = vmatprep.subr.mxu0 0.0
      %1847 = vmatpush1.msra.mxu0 0.0
      %1848 = vmatprep.subr.mxu0 0.0
      %1849 = vmatpush1.msra.mxu0 0.0
      %1850 = vmatprep.subr.mxu0 0.0
      %1851 = vmatpush1.msra.mxu0 0.0
      %1852 = vmatprep.subr.mxu0 0.0
      %1853 = vmatpush1.msra.mxu0 0.0
      %1854 = vmatprep.subr.mxu0 0.0
      %1855 = vmatpush1.msra.mxu0 0.0
      %1856 = vmatprep.subr.mxu0 0.0
      %1857 = vmatpush1.msra.mxu0 0.0
      %1858 = vmatprep.subr.mxu0 0.0
      %1859 = vmatpush1.msra.mxu0 0.0
      %1860 = vmatprep.subr.mxu0 0.0
      %1861 = vmatpush1.msra.mxu0 0.0
      %1862 = vmatprep.subr.mxu0 0.0
      %1863 = vmatpush1.msra.mxu0 0.0
      %1864 = vmatprep.subr.mxu0 0.0
      %1865 = vmatpush1.msra.mxu0 0.0
      %1866 = vmatprep.subr.mxu0 0.0
      %1867 = vmatpush1.msra.mxu0 0.0
      %1868 = vmatprep.subr.mxu0 0.0
      %1869 = vmatpush1.msra.mxu0 0.0
      %1870 = vmatprep.subr.mxu0 0.0
      %1871 = vmatpush1.msra.mxu0 0.0
      %1872 = vmatprep.mubr.f32.mxu0 0.0
      %1873 = vmatmul.mubr.f32.gmra.mrb[0].mxu0 %v1785
      %v1874 = vpop.f32.mrb[0].mxu0
      %v1875 = vadd.f32 0.0, %v1874
      %v1876 = vpop.f32.mrb[0].mxu0
      %1877 = vmatprep.mubr.f32.mxu0 0.0
      %1878 = vmatmul.mubr.f32.gmra.mrb[0].mxu0 %v1788
      %v1879 = vpop.f32.mrb[0].mxu0
      %v1880 = vadd.f32 0.0, %v1879
      %v1881 = vpop.f32.mrb[0].mxu0
      %1882 = vmatprep.mubr.f32.mxu0 0.0
      %1883 = vmatmul.mubr.f32.gmra.mrb[0].mxu0 %v1791
      %v1884 = vpop.f32.mrb[0].mxu0
      %v1885 = vadd.f32 0.0, %v1884
      %v1886 = vpop.f32.mrb[0].mxu0
      %1887 = vmatprep.mubr.f32.mxu0 0.0
      %1888 = vmatmul.mubr.f32.gmra.mrb[0].mxu0 %v1794
      %v1889 = vpop.f32.mrb[0].mxu0
      %v1890 = vadd.f32 0.0, %v1889
      %v1891 = vpop.f32.mrb[0].mxu0
      %1892 = vmatprep.mubr.f32.mxu0 0.0
      %1893 = vmatmul.mubr.f32.gmra.mrb[0].mxu0 %v1797
      %v1894 = vpop.f32.mrb[0].mxu0
      %v1895 = vadd.f32 0.0, %v1894
      %v1896 = vpop.f32.mrb[0].mxu0
      %1897 = vmatprep.mubr.f32.mxu0 0.0
      %1898 = vmatmul.mubr.f32.gmra.mrb[0].mxu0 %v1800
      %v1899 = vpop.f32.mrb[0].mxu0
      %v1900 = vadd.f32 0.0, %v1899
      %v1901 = vpop.f32.mrb[0].mxu0
      %1902 = vmatprep.mubr.f32.mxu0 0.0
      %1903 = vmatmul.mubr.f32.gmra.mrb[0].mxu0 %v1803
      %v1904 = vpop.f32.mrb[0].mxu0
      %v1905 = vadd.f32 0.0, %v1904
      %v1906 = vpop.f32.mrb[0].mxu0
      %1907 = vmatprep.mubr.f32.mxu0 0.0
      %1908 = vmatmul.mubr.f32.gmra.mrb[0].mxu0 %v1806
      %v1909 = vpop.f32.mrb[0].mxu0
      %v1910 = vadd.f32 0.0, %v1909
      %v1911 = vpop.f32.mrb[0].mxu0
      %1912 = vdwg.mxu0
      %v1914 = vsel %vm328, %v1032, 0
      %v1917 = vsel %vm328, %v1033, 0
      %v1920 = vsel %vm328, %v1034, 0
      %v1923 = vsel %vm328, %v1035, 0
      %v1926 = vsel %vm328, %v1036, 0
      %v1929 = vsel %vm328, %v1037, 0
      %v1932 = vsel %vm328, %v1038, 0
      %v1935 = vsel %vm328, %v1039, 0
      %1937 = vmatprep.subr.mxu0 0.0
      %1938 = vmatpush1.msra.mxu0 %v1040
      %1939 = vmatprep.subr.mxu0 0.0
      %1940 = vmatpush1.msra.mxu0 0.0
      %1941 = vmatprep.subr.mxu0 0.0
      %1942 = vmatpush1.msra.mxu0 0.0
      %1943 = vmatprep.subr.mxu0 0.0
      %1944 = vmatpush1.msra.mxu0 0.0
      %1945 = vmatprep.subr.mxu0 0.0
      %1946 = vmatpush1.msra.mxu0 0.0
      %1947 = vmatprep.subr.mxu0 0.0
      %1948 = vmatpush1.msra.mxu0 0.0
      %1949 = vmatprep.subr.mxu0 0.0
      %1950 = vmatpush1.msra.mxu0 0.0
      %1951 = vmatprep.subr.mxu0 0.0
      %1952 = vmatpush1.msra.mxu0 0.0
      %1953 = vmatprep.subr.mxu0 0.0
      %1954 = vmatpush1.msra.mxu0 0.0
      %1955 = vmatprep.subr.mxu0 0.0
      %1956 = vmatpush1.msra.mxu0 0.0
      %1957 = vmatprep.subr.mxu0 0.0
      %1958 = vmatpush1.msra.mxu0 0.0
      %1959 = vmatprep.subr.mxu0 0.0
      %1960 = vmatpush1.msra.mxu0 0.0
      %1961 = vmatprep.subr.mxu0 0.0
      %1962 = vmatpush1.msra.mxu0 0.0
      %1963 = vmatprep.subr.mxu0 0.0
      %1964 = vmatpush1.msra.mxu0 0.0
      %1965 = vmatprep.subr.mxu0 0.0
      %1966 = vmatpush1.msra.mxu0 0.0
      %1967 = vmatprep.subr.mxu0 0.0
      %1968 = vmatpush1.msra.mxu0 0.0
      %1969 = vmatprep.subr.mxu0 0.0
      %1970 = vmatpush1.msra.mxu0 0.0
      %1971 = vmatprep.subr.mxu0 0.0
      %1972 = vmatpush1.msra.mxu0 0.0
      %1973 = vmatprep.subr.mxu0 0.0
      %1974 = vmatpush1.msra.mxu0 0.0
      %1975 = vmatprep.subr.mxu0 0.0
      %1976 = vmatpush1.msra.mxu0 0.0
      %1977 = vmatprep.subr.mxu0 0.0
      %1978 = vmatpush1.msra.mxu0 0.0
      %1979 = vmatprep.subr.mxu0 0.0
      %1980 = vmatpush1.msra.mxu0 0.0
      %1981 = vmatprep.subr.mxu0 0.0
      %1982 = vmatpush1.msra.mxu0 0.0
      %1983 = vmatprep.subr.mxu0 0.0
      %1984 = vmatpush1.msra.mxu0 0.0
      %1985 = vmatprep.subr.mxu0 0.0
      %1986 = vmatpush1.msra.mxu0 0.0
      %1987 = vmatprep.subr.mxu0 0.0
      %1988 = vmatpush1.msra.mxu0 0.0
      %1989 = vmatprep.subr.mxu0 0.0
      %1990 = vmatpush1.msra.mxu0 0.0
      %1991 = vmatprep.subr.mxu0 0.0
      %1992 = vmatpush1.msra.mxu0 0.0
      %1993 = vmatprep.subr.mxu0 0.0
      %1994 = vmatpush1.msra.mxu0 0.0
      %1995 = vmatprep.subr.mxu0 0.0
      %1996 = vmatpush1.msra.mxu0 0.0
      %1997 = vmatprep.subr.mxu0 0.0
      %1998 = vmatpush1.msra.mxu0 0.0
      %1999 = vmatprep.subr.mxu0 0.0
      %2000 = vmatpush1.msra.mxu0 0.0
      %2001 = vmatprep.mubr.f32.mxu0 0.0
      %2002 = vmatmul.mubr.f32.gmra.mrb[0].mxu0 %v1914
      %v2003 = vpop.f32.mrb[0].mxu0
      %v2004 = vadd.f32 %v1875, %v2003
      %v2005 = vpop.f32.mrb[0].mxu0
      %2006 = vmatprep.mubr.f32.mxu0 0.0
      %2007 = vmatmul.mubr.f32.gmra.mrb[0].mxu0 %v1917
      %v2008 = vpop.f32.mrb[0].mxu0
      %v2009 = vadd.f32 %v1880, %v2008
      %v2010 = vpop.f32.mrb[0].mxu0
      %2011 = vmatprep.mubr.f32.mxu0 0.0
      %2012 = vmatmul.mubr.f32.gmra.mrb[0].mxu0 %v1920
      %v2013 = vpop.f32.mrb[0].mxu0
      %v2014 = vadd.f32 %v1885, %v2013
      %v2015 = vpop.f32.mrb[0].mxu0
      %2016 = vmatprep.mubr.f32.mxu0 0.0
      %2017 = vmatmul.mubr.f32.gmra.mrb[0].mxu0 %v1923
      %v2018 = vpop.f32.mrb[0].mxu0
      %v2019 = vadd.f32 %v1890, %v2018
      %v2020 = vpop.f32.mrb[0].mxu0
      %2021 = vmatprep.mubr.f32.mxu0 0.0
      %2022 = vmatmul.mubr.f32.gmra.mrb[0].mxu0 %v1926
      %v2023 = vpop.f32.mrb[0].mxu0
      %v2024 = vadd.f32 %v1895, %v2023
      %v2025 = vpop.f32.mrb[0].mxu0
      %2026 = vmatprep.mubr.f32.mxu0 0.0
      %2027 = vmatmul.mubr.f32.gmra.mrb[0].mxu0 %v1929
      %v2028 = vpop.f32.mrb[0].mxu0
      %v2029 = vadd.f32 %v1900, %v2028
      %v2030 = vpop.f32.mrb[0].mxu0
      %2031 = vmatprep.mubr.f32.mxu0 0.0
      %2032 = vmatmul.mubr.f32.gmra.mrb[0].mxu0 %v1932
      %v2033 = vpop.f32.mrb[0].mxu0
      %v2034 = vadd.f32 %v1905, %v2033
      %v2035 = vpop.f32.mrb[0].mxu0
      %2036 = vmatprep.mubr.f32.mxu0 0.0
      %2037 = vmatmul.mubr.f32.gmra.mrb[0].mxu0 %v1935
      %v2038 = vpop.f32.mrb[0].mxu0
      %v2039 = vadd.f32 %v1910, %v2038
      %v2040 = vpop.f32.mrb[0].mxu0
      %2041 = vdwg.mxu0
      %v2042 = vld [vmem:[%s6] sm:$0x1]
      %v2044 = vlaneseq
      %v2045 = vshrl.u32 %v2044, 7
      %v2046 = vsub.s32 0, %v2045
      %v2047 = vrot.slane %v2042, %v2046
      %v2049 = vadd.f32 %v2004, %v2047
      %v2050 = vadd.f32 %v2009, %v2047
      %v2051 = vadd.f32 %v2014, %v2047
      %v2052 = vadd.f32 %v2019, %v2047
      %v2053 = vadd.f32 %v2024, %v2047
      %v2054 = vadd.f32 %v2029, %v2047
      %v2055 = vadd.f32 %v2034, %v2047
      %v2056 = vadd.f32 %v2039, %v2047
      %2057 = vst.msk [vmem:[%s305] sm:$0xff] %vm328, %v2049
      %2058 = vst.msk [vmem:[%s305 + $0x8] sm:$0xff] %vm328, %v2050
      %2059 = vst.msk [vmem:[%s305 + $0x10] sm:$0xff] %vm328, %v2051
      %2060 = vst.msk [vmem:[%s305 + $0x18] sm:$0xff] %vm328, %v2052
      %2061 = vst.msk [vmem:[%s305 + $0x20] sm:$0xff] %vm328, %v2053
      %2062 = vst.msk [vmem:[%s305 + $0x28] sm:$0xff] %vm328, %v2054
      %2063 = vst.msk [vmem:[%s305 + $0x30] sm:$0xff] %vm328, %v2055
      %2064 = vst.msk [vmem:[%s305 + $0x38] sm:$0xff] %vm328, %v2056
      %p2065 = scmp.lt.s32.totalorder %s19, 1
      %s2066 = scalar_select %p2065, %s19, 1
      %s2067 = smul.addr %s2066, 8
      %s2068 = smul.addr %s2067, 8
      %s2069 = scalar_lea.vmem %s8, %s2068
      // Predicated region
      $region53: #{tpu_custom_call.1} parent=51 // pred_check
        %p2070 = pneg %p210
      $region54: #{tpu_custom_call.1} parent=51 // pred_check_branch
        %2072 = sbr.rel (%p2070) target = $region56
      $region55: #{tpu_custom_call.1} parent=51 // pred_region
        _
      $region56: #{tpu_custom_call.1} parent=51 // pred_fallthru
        _
    $region52: #{tpu_custom_call.1} parent=5 // pred_fallthru
      _
    %p2073 = scmp.le.s32.totalorder 2, %s14
    // Predicated region
    $region57: #{tpu_custom_call.1} parent=5 // pred_check
      %p2074 = pneg %p2073
    $region58: #{tpu_custom_call.1} parent=5 // pred_check_branch
      %2076 = sbr.rel (%p2074) target = $region60
    $region59: #{tpu_custom_call.1} parent=5 // pred_region
      %s2077 = ssub.s32 %s14, 2
      // Predicated region
      $region61: #{tpu_custom_call.1} parent=59 // pred_check
        %p2078 = pneg %p216
      $region62: #{tpu_custom_call.1} parent=59 // pred_check_branch
        %2080 = sbr.rel (%p2078) target = $region64
      $region63: #{tpu_custom_call.1} parent=59 // pred_region
        %p2081 = scmp.lt.s32.totalorder %s20, 1
        %s2082 = scalar_select %p2081, %s20, 1
        %s2083 = smul.addr %s2082, 8
        %s2084 = smul.addr %s2083, 8
        %s2085 = scalar_lea.vmem %s8, %s2084
      $region64: #{tpu_custom_call.1} parent=59 // pred_fallthru
        _
    $region60: #{tpu_custom_call.1} parent=5 // pred_fallthru
      _
  $region6: #{tpu_custom_call.1} parent=0 // loop_footer
    %s18 = sadd.s32 1, %s14
  $region7: #{tpu_custom_call.1} parent=0 // loop_footer_branch
    %13 = sbr.rel target = $region3
  $region8: #{tpu_custom_call.1} parent=0 // loop_exit
    _

</llo_original>
